<compile_context>
chip_gen: v7x
topology: tpu7x:2x2x1
jax: 0.10.0
libtpu: 0.0.40
codegen_flags: <defaults>
</compile_context>

<pallas_src>
import functools

import jax
import jax.numpy as jnp
from jax.experimental import pallas as pl
from jax.experimental.pallas import tpu as pltpu

K_IN = 28 * 28          # 784 = 49 * 16 -> packs cleanly as bf16 sublanes
H = 512                 # hidden width
N_OUT = 10              # logits
N_PAD = 128             # padded logits lane width (lane-dense stores)


def _round_up(x, m):
    return ((x + m - 1) // m) * m


@functools.lru_cache(maxsize=1)
def _device_tuning():
    """Per-generation tile size / VMEM limit / epilogue-dtype choices."""
    try:
        kind = jax.devices()[0].device_kind.lower()
    except Exception:
        kind = ""
    if "v5e" in kind or "v5 lite" in kind or "v5lite" in kind:
        # v5e: default 16 MiB scoped VMEM is the binding limit; no bf16 VALU.
        return dict(tm_max=1024, vmem_bytes=64 << 20, min_steps=1,
                    epi_dtype=jnp.float32)
    if "v6" in kind:
        return dict(tm_max=2048, vmem_bytes=96 << 20, min_steps=1,
                    epi_dtype=jnp.bfloat16)
    if "v7" in kind:
        # 64 MiB per-TC VMEM; keep >= 2 grid steps so both TensorCores work.
        return dict(tm_max=2048, vmem_bytes=48 << 20, min_steps=2,
                    epi_dtype=jnp.bfloat16)
    if "v4" in kind or "v5" in kind:   # v4 / v5p megacore
        return dict(tm_max=1024, vmem_bytes=64 << 20, min_steps=2,
                    epi_dtype=jnp.float32)
    return dict(tm_max=1024, vmem_bytes=64 << 20, min_steps=1,
                epi_dtype=jnp.float32)


def mlp_kernel(x_ref, w1_ref, b1_ref, w2_ref, b2_ref, w3_ref, b3_ref, o_ref,
               *, epi_dtype):
    # x tile arrives as raw f32 (tm, 784); cast to bf16 in VMEM (avoids a
    # separate wrapper-side pad/cast HBM round trip).
    x_bf = x_ref[...].astype(jnp.bfloat16)
    # fc1 + ReLU : bf16 MXU inputs, f32 accumulation, epilogue in epi_dtype.
    h1 = jnp.dot(x_bf, w1_ref[...], preferred_element_type=jnp.float32)
    h1 = jnp.maximum(h1.astype(epi_dtype) + b1_ref[...], 0.0).astype(jnp.bfloat16)
    # fc2 + ReLU
    h2 = jnp.dot(h1, w2_ref[...], preferred_element_type=jnp.float32)
    h2 = jnp.maximum(h2.astype(epi_dtype) + b2_ref[...], 0.0).astype(jnp.bfloat16)
    # fc3 (logits, padded to 128 output lanes, no activation)
    out = jnp.dot(h2, w3_ref[...], preferred_element_type=jnp.float32)
    o_ref[...] = out + b3_ref[...]


def init_params(key):
    """f32 params matching nn.Linear's U(-1/sqrt(fan_in), +1/sqrt(fan_in)) init.

    Stored as (in, out) — the transpose of PyTorch's (out, in) layout.
    """
    dims = [(K_IN, H), (H, H), (H, N_OUT)]
    params = []
    for fan_in, fan_out in dims:
        kw, kb, key = jax.random.split(key, 3)
        bound = 1.0 / jnp.sqrt(jnp.float32(fan_in))
        w = jax.random.uniform(kw, (fan_in, fan_out), jnp.float32, -bound, bound)
        b = jax.random.uniform(kb, (1, fan_out), jnp.float32, -bound, bound)
        params.extend([w, b])
    return tuple(params)


def prepare_params(params):
    """Cast weights to bf16 (halves HBM weight traffic), pad fc3 out 10->128,
    keep b1/b2 in the epilogue dtype (bf16 on v6e/v7x, f32 on v5e) and b3 f32."""
    epi_dtype = _device_tuning()["epi_dtype"]
    w1, b1, w2, b2, w3, b3 = params
    w1p = w1.astype(jnp.bfloat16)                                    # (784, 512)
    w2p = w2.astype(jnp.bfloat16)                                    # (512, 512)
    w3p = jnp.pad(w3, ((0, 0), (0, N_PAD - N_OUT))).astype(jnp.bfloat16)
    b1p = b1.astype(epi_dtype)
    b2p = b2.astype(epi_dtype)
    b3p = jnp.pad(b3, ((0, 0), (0, N_PAD - N_OUT))).astype(jnp.float32)
    return (w1p, b1p, w2p, b2p, w3p, b3p)


@jax.jit
def mlp_forward(x, prepared_params):
    """x: (B, 1, 28, 28) or (B, 784) float32 -> (B, 10) float32 logits."""
    w1, b1, w2, b2, w3, b3 = prepared_params
    tune = _device_tuning()

    x2d = x.reshape(-1, K_IN).astype(jnp.float32)          # x.view(-1, 784)
    B = x2d.shape[0]

    # Adaptive row tile: amortize the ~0.35us/step pipeline overhead with big
    # tiles, minimize zero-row padding, keep tm % 16 == 0 (bf16 (16,128) vregs),
    # and keep >= 2 steps on megacore parts so both TensorCores are used.
    steps = max(tune["min_steps"], pl.cdiv(B, tune["tm_max"]))
    tm = _round_up(pl.cdiv(B, steps), 16)
    b_pad = steps * tm
    if b_pad != B:
        x2d = jnp.pad(x2d, ((0, b_pad - B), (0, 0)))

    const = lambda i: (0, 0)   # weights/biases stay resident in VMEM
    # TODO(synk): pipeline_mode=pl.Buffered(1) on the resident weight specs and
    # int8 weight quantization were suggested but skipped; VMEM headroom is
    # ample at these tile sizes and int8 is not portable to v7x.
    out = pl.pallas_call(
        functools.partial(mlp_kernel, epi_dtype=tune["epi_dtype"]),
        out_shape=jax.ShapeDtypeStruct((b_pad, N_PAD), jnp.float32),
        grid=(steps,),
        in_specs=[
            pl.BlockSpec((tm, K_IN), lambda i: (i, 0)),     # x tile (f32, K unpadded)
            pl.BlockSpec((K_IN, H), const),                 # w1
            pl.BlockSpec((1, H), const),                    # b1
            pl.BlockSpec((H, H), const),                    # w2
            pl.BlockSpec((1, H), const),                    # b2
            pl.BlockSpec((H, N_PAD), const),                # w3 (out-padded)
            pl.BlockSpec((1, N_PAD), const),                # b3 (out-padded)
        ],
        out_specs=pl.BlockSpec((tm, N_PAD), lambda i: (i, 0)),
        compiler_params=pltpu.CompilerParams(
            dimension_semantics=("parallel",),
            vmem_limit_bytes=tune["vmem_bytes"]),
    )(x2d, w1, b1, w2, b2, w3, b3)

    return out[:B, :N_OUT]


def _ref_forward(x, prepared_params):
    """Plain-JAX reference mimicking the kernel's bf16-matmul / epilogue path."""
    epi_dtype = _device_tuning()["epi_dtype"]
    w1, b1, w2, b2, w3, b3 = prepared_params
    xf = x.reshape(-1, K_IN).astype(jnp.float32).astype(jnp.bfloat16)
    h1 = jnp.dot(xf, w1, preferred_element_type=jnp.float32)
    h1 = jnp.maximum(h1.astype(epi_dtype) + b1, 0.0).astype(jnp.bfloat16)
    h2 = jnp.dot(h1, w2, preferred_element_type=jnp.float32)
    h2 = jnp.maximum(h2.astype(epi_dtype) + b2, 0.0).astype(jnp.bfloat16)
    out = jnp.dot(h2, w3, preferred_element_type=jnp.float32) + b3
    return out[:, :N_OUT]


if __name__ == "__main__":
    key = jax.random.PRNGKey(0)
    kx, kp = jax.random.split(key)

    # Small MNIST-like batch.
    x = jax.random.normal(kx, (8, 1, 28, 28), dtype=jnp.float32)
    params = init_params(kp)
    prepared = prepare_params(params)

    out = mlp_forward(x, prepared)
    out = jax.block_until_ready(out)
    assert out.shape == (8, N_OUT)

    ref = _ref_forward(x, prepared)
    assert jnp.allclose(out, ref, atol=2e-2, rtol=2e-2), (
        float(jnp.max(jnp.abs(out - ref))))

    print("KERNEL_OK")
</pallas_src>

<mosaic_0001>
module attributes {stable_mosaic.version = 11 : i64} {
  func.func @mlp_kernel(%arg0: i32, %arg1: memref<16x784xf32, #tpu.memory_space<vmem>>, %arg2: memref<784x512xbf16, #tpu.memory_space<vmem>>, %arg3: memref<1x512xf32, #tpu.memory_space<vmem>>, %arg4: memref<512x512xbf16, #tpu.memory_space<vmem>>, %arg5: memref<1x512xf32, #tpu.memory_space<vmem>>, %arg6: memref<512x128xbf16, #tpu.memory_space<vmem>>, %arg7: memref<1x128xf32, #tpu.memory_space<vmem>>, %arg8: memref<16x128xf32, #tpu.memory_space<vmem>>) attributes {dimension_semantics = [#tpu.dimension_semantics<parallel>], iteration_bounds = array<i64: 1>, scalar_prefetch = 0 : i64, scratch_operands = 0 : i64, tpu.core_type = #tpu.core_type<tc>, window_params = [{transform_indices = @transform_0, window_bounds = array<i64: 16, 784>}, {pipeline_mode = #tpu.pipeline_mode<synchronous>, transform_indices = @transform_1, window_bounds = array<i64: 784, 512>}, {pipeline_mode = #tpu.pipeline_mode<synchronous>, transform_indices = @transform_2, window_bounds = array<i64: 1, 512>}, {pipeline_mode = #tpu.pipeline_mode<synchronous>, transform_indices = @transform_3, window_bounds = array<i64: 512, 512>}, {pipeline_mode = #tpu.pipeline_mode<synchronous>, transform_indices = @transform_4, window_bounds = array<i64: 1, 512>}, {pipeline_mode = #tpu.pipeline_mode<synchronous>, transform_indices = @transform_5, window_bounds = array<i64: 512, 128>}, {pipeline_mode = #tpu.pipeline_mode<synchronous>, transform_indices = @transform_6, window_bounds = array<i64: 1, 128>}, {transform_indices = @transform_7, window_bounds = array<i64: 16, 128>}]} {
    %c0 = arith.constant 0 : index
    %c0_0 = arith.constant 0 : index
    %0 = vector.load %arg1[%c0, %c0_0] : memref<16x784xf32, #tpu.memory_space<vmem>>, vector<16x784xf32>
    %1 = arith.truncf %0 : vector<16x784xf32> to vector<16x784xbf16>
    %c0_1 = arith.constant 0 : index
    %c0_2 = arith.constant 0 : index
    %2 = vector.load %arg2[%c0_1, %c0_2] : memref<784x512xbf16, #tpu.memory_space<vmem>>, vector<784x512xbf16>
    %cst = arith.constant dense<0.000000e+00> : vector<16x512xf32>
    %3 = tpu.matmul %1, %2, %cst {dimension_numbers = #tpu.dot_dimension_numbers<[1], [0], [0], [1], [0, 0, 1, 1], [], []>} : vector<16x784xbf16>, vector<784x512xbf16>, vector<16x512xf32> -> vector<16x512xf32>
    %c0_3 = arith.constant 0 : index
    %c0_4 = arith.constant 0 : index
    %4 = vector.load %arg3[%c0_3, %c0_4] : memref<1x512xf32, #tpu.memory_space<vmem>>, vector<1x512xf32>
    %5 = vector.broadcast %4 : vector<1x512xf32> to vector<16x512xf32>
    %6 = arith.addf %3, %5 : vector<16x512xf32>
    %cst_5 = arith.constant 0.000000e+00 : f32
    %7 = vector.broadcast %cst_5 : f32 to vector<16x512xf32>
    %8 = arith.maximumf %6, %7 : vector<16x512xf32>
    %9 = arith.truncf %8 : vector<16x512xf32> to vector<16x512xbf16>
    %c0_6 = arith.constant 0 : index
    %c0_7 = arith.constant 0 : index
    %10 = vector.load %arg4[%c0_6, %c0_7] : memref<512x512xbf16, #tpu.memory_space<vmem>>, vector<512x512xbf16>
    %cst_8 = arith.constant dense<0.000000e+00> : vector<16x512xf32>
    %11 = tpu.matmul %9, %10, %cst_8 {dimension_numbers = #tpu.dot_dimension_numbers<[1], [0], [0], [1], [0, 0, 1, 1], [], []>} : vector<16x512xbf16>, vector<512x512xbf16>, vector<16x512xf32> -> vector<16x512xf32>
    %c0_9 = arith.constant 0 : index
    %c0_10 = arith.constant 0 : index
    %12 = vector.load %arg5[%c0_9, %c0_10] : memref<1x512xf32, #tpu.memory_space<vmem>>, vector<1x512xf32>
    %13 = vector.broadcast %12 : vector<1x512xf32> to vector<16x512xf32>
    %14 = arith.addf %11, %13 : vector<16x512xf32>
    %cst_11 = arith.constant 0.000000e+00 : f32
    %15 = vector.broadcast %cst_11 : f32 to vector<16x512xf32>
    %16 = arith.maximumf %14, %15 : vector<16x512xf32>
    %17 = arith.truncf %16 : vector<16x512xf32> to vector<16x512xbf16>
    %c0_12 = arith.constant 0 : index
    %c0_13 = arith.constant 0 : index
    %18 = vector.load %arg6[%c0_12, %c0_13] : memref<512x128xbf16, #tpu.memory_space<vmem>>, vector<512x128xbf16>
    %cst_14 = arith.constant dense<0.000000e+00> : vector<16x128xf32>
    %19 = tpu.matmul %17, %18, %cst_14 {dimension_numbers = #tpu.dot_dimension_numbers<[1], [0], [0], [1], [0, 0, 1, 1], [], []>} : vector<16x512xbf16>, vector<512x128xbf16>, vector<16x128xf32> -> vector<16x128xf32>
    %c0_15 = arith.constant 0 : index
    %c0_16 = arith.constant 0 : index
    %20 = vector.load %arg7[%c0_15, %c0_16] : memref<1x128xf32, #tpu.memory_space<vmem>>, vector<1x128xf32>
    %21 = vector.broadcast %20 : vector<1x128xf32> to vector<16x128xf32>
    %22 = arith.addf %19, %21 : vector<16x128xf32>
    %c0_17 = arith.constant 0 : index
    %c0_18 = arith.constant 0 : index
    %23 = vector.load %arg8[%c0_17, %c0_18] : memref<16x128xf32, #tpu.memory_space<vmem>>, vector<16x128xf32>
    tpu.vector_store %arg8[%c0_17, %c0_18], %22 {strides = array<i32>} : memref<16x128xf32, #tpu.memory_space<vmem>>, vector<16x128xf32>,
    return
  }
  func.func @transform_0(%arg0: i32) -> (i32, i32) {
    %c0_i32 = arith.constant 0 : i32
    %c0_i32_0 = arith.constant 0 : i32
    return %arg0, %c0_i32 : i32, i32
  }
  func.func @transform_1(%arg0: i32) -> (i32, i32) {
    %c0_i32 = arith.constant 0 : i32
    %c0_i32_0 = arith.constant 0 : i32
    %c0_i32_1 = arith.constant 0 : i32
    return %c0_i32, %c0_i32_0 : i32, i32
  }
  func.func @transform_2(%arg0: i32) -> (i32, i32) {
    %c0_i32 = arith.constant 0 : i32
    %c0_i32_0 = arith.constant 0 : i32
    %c0_i32_1 = arith.constant 0 : i32
    return %c0_i32, %c0_i32_0 : i32, i32
  }
  func.func @transform_3(%arg0: i32) -> (i32, i32) {
    %c0_i32 = arith.constant 0 : i32
    %c0_i32_0 = arith.constant 0 : i32
    %c0_i32_1 = arith.constant 0 : i32
    return %c0_i32, %c0_i32_0 : i32, i32
  }
  func.func @transform_4(%arg0: i32) -> (i32, i32) {
    %c0_i32 = arith.constant 0 : i32
    %c0_i32_0 = arith.constant 0 : i32
    %c0_i32_1 = arith.constant 0 : i32
    return %c0_i32, %c0_i32_0 : i32, i32
  }
  func.func @transform_5(%arg0: i32) -> (i32, i32) {
    %c0_i32 = arith.constant 0 : i32
    %c0_i32_0 = arith.constant 0 : i32
    %c0_i32_1 = arith.constant 0 : i32
    return %c0_i32, %c0_i32_0 : i32, i32
  }
  func.func @transform_6(%arg0: i32) -> (i32, i32) {
    %c0_i32 = arith.constant 0 : i32
    %c0_i32_0 = arith.constant 0 : i32
    %c0_i32_1 = arith.constant 0 : i32
    return %c0_i32, %c0_i32_0 : i32, i32
  }
  func.func @transform_7(%arg0: i32) -> (i32, i32) {
    %c0_i32 = arith.constant 0 : i32
    %c0_i32_0 = arith.constant 0 : i32
    return %arg0, %c0_i32 : i32, i32
  }
}

</mosaic_0001>

<llo_original>
// kernel: mlp_forward.1
$region0: #{mlp_forward.1}
  #allocation0 [shape = 'u32[]', space=smem, size = 0x4, offset = 0x4, fixed_abs, tag = 'smem constant byte address 0x4 - core index']
  #allocation1 [shape = 'u32[144,128]{1,0:T(1,128)}', space=vmem, size = 0x12000, scoped, tag = 'internal scratch']
  %s0 = inlined_call_operand.hbm [shape: f32[16,784], index: 0, kind: input, shape index: {}]
  %s1 = inlined_call_operand.hbm [shape: bf16[784,512], index: 1, kind: input, shape index: {}]
  %s2 = inlined_call_operand.hbm [shape: f32[1,512], index: 2, kind: input, shape index: {}]
  %s3 = inlined_call_operand.hbm [shape: bf16[512,512], index: 3, kind: input, shape index: {}]
  %s4 = inlined_call_operand.hbm [shape: f32[1,512], index: 4, kind: input, shape index: {}]
  %s5 = inlined_call_operand.hbm [shape: bf16[512,128], index: 5, kind: input, shape index: {}]
  %s6 = inlined_call_operand.hbm [shape: f32[1,128], index: 6, kind: input, shape index: {}]
  %s7 = inlined_call_operand.hbm [shape: f32[16,128], index: 7, kind: output, shape index: {}]
  %s8 = sld [smem:[#allocation0]]
  $region66: #{mlp_forward.1} parent=0
    _
  %s10 = ssub.s32 1, %s8
  %s11 = scalar_select 0, %s10, %s8
  $region1: #{mlp_forward.1} parent=0
    #allocation2 [shape = 'u8[57344]{0}', space=vmem, size = 0xe000, scoped, tag = 'input window, operand 0, single buffered']
    #allocation3 [shape = 's32[1]{0}', space=sflag, size = 0x4, scoped, tag = 'scoped memory for mlp_forward.1']
    #allocation4 [shape = 's32[1]{0}', space=sflag, size = 0x4, scoped, tag = 'scoped memory for mlp_forward.1']
    #allocation5 [shape = 'u8[802816]{0}', space=vmem, size = 0xc4000, scoped, tag = 'input window, operand 1, single buffered']
    #allocation6 [shape = 's32[1]{0}', space=sflag, size = 0x4, scoped, tag = 'scoped memory for mlp_forward.1']
    #allocation7 [shape = 'u8[2048]{0}', space=vmem, size = 0x800, scoped, tag = 'input window, operand 2, single buffered']
    #allocation8 [shape = 'u8[524288]{0}', space=vmem, size = 0x80000, scoped, tag = 'input window, operand 3, single buffered']
    #allocation9 [shape = 's32[1]{0}', space=sflag, size = 0x4, scoped, tag = 'scoped memory for mlp_forward.1']
    #allocation10 [shape = 'u8[2048]{0}', space=vmem, size = 0x800, scoped, tag = 'input window, operand 4, single buffered']
    #allocation11 [shape = 'u8[131072]{0}', space=vmem, size = 0x20000, scoped, tag = 'input window, operand 5, single buffered']
    #allocation12 [shape = 's32[1]{0}', space=sflag, size = 0x4, scoped, tag = 'scoped memory for mlp_forward.1']
    #allocation13 [shape = 'u8[512]{0}', space=vmem, size = 0x400, scoped, tag = 'input window, operand 6, single buffered']
    #allocation14 [shape = 'u8[8192]{0}', space=vmem, size = 0x2000, scoped, tag = 'output window, operand 0, single buffered']
    %12 = vsyncpa [#allocation3], 0
    %13 = vsyncpa [#allocation6], 0
    %14 = vsyncpa [#allocation9], 0
    %15 = vsyncpa [#allocation12], 0
    %16 = vsyncpa [#allocation4], 0
    // Predicated region
    $region2: #{mlp_forward.1} parent=1 // pred_check
      _
    $region3: #{mlp_forward.1} parent=1 // pred_check_branch
      %18 = sbr.rel (0) target = $region5
    $region4: #{mlp_forward.1} parent=1 // pred_region
      %s20 = ssub.s32 1792, 1792
      %21 = vsyncadd [#allocation3], %s20
      %s22 = sshll.u32 [#allocation2], 4
      %s23 = int_to_ptr.vmem [resolvable:$true] %s22
      %28 = dma.hbm_to_vmem [thread:$0]  %s0, 1792, %s23, [#allocation3], 896, 896, 56
    $region5: #{mlp_forward.1} parent=1 // pred_fallthru
      _
    // Predicated region
    $region6: #{mlp_forward.1} parent=1 // pred_check
      _
    $region7: #{mlp_forward.1} parent=1 // pred_check_branch
      %30 = sbr.rel (0) target = $region9
    $region8: #{mlp_forward.1} parent=1 // pred_region
      %s32 = ssub.s32 25088, 25088
      %33 = vsyncadd [#allocation6], %s32
      %s34 = sshll.u32 [#allocation5], 4
      %s35 = int_to_ptr.vmem [resolvable:$true] %s34
      %40 = dma.hbm_to_vmem [thread:$0]  %s1, 25088, %s35, [#allocation6], 256, 256, 16
    $region9: #{mlp_forward.1} parent=1 // pred_fallthru
      _
    // Predicated region
    $region10: #{mlp_forward.1} parent=1 // pred_check
      _
    $region11: #{mlp_forward.1} parent=1 // pred_check_branch
      %42 = sbr.rel (0) target = $region13
    $region12: #{mlp_forward.1} parent=1 // pred_region
      %s44 = ssub.s32 64, 64
      %45 = vsyncadd [#allocation6], %s44
      %s47 = sshll.u32 [#allocation7], 4
      %s48 = int_to_ptr.vmem [resolvable:$true] %s47
      %50 = dma.hbm_to_vmem [thread:$0]  %s2, 64, %s48, [#allocation6]
    $region13: #{mlp_forward.1} parent=1 // pred_fallthru
      _
    // Predicated region
    $region14: #{mlp_forward.1} parent=1 // pred_check
      _
    $region15: #{mlp_forward.1} parent=1 // pred_check_branch
      %52 = sbr.rel (0) target = $region17
    $region16: #{mlp_forward.1} parent=1 // pred_region
      %s54 = ssub.s32 16384, 16384
      %55 = vsyncadd [#allocation9], %s54
      %s56 = sshll.u32 [#allocation8], 4
      %s57 = int_to_ptr.vmem [resolvable:$true] %s56
      %62 = dma.hbm_to_vmem [thread:$0]  %s3, 16384, %s57, [#allocation9], 256, 256, 16
    $region17: #{mlp_forward.1} parent=1 // pred_fallthru
      _
    // Predicated region
    $region18: #{mlp_forward.1} parent=1 // pred_check
      _
    $region19: #{mlp_forward.1} parent=1 // pred_check_branch
      %64 = sbr.rel (0) target = $region21
    $region20: #{mlp_forward.1} parent=1 // pred_region
      %s66 = ssub.s32 64, 64
      %67 = vsyncadd [#allocation9], %s66
      %s69 = sshll.u32 [#allocation10], 4
      %s70 = int_to_ptr.vmem [resolvable:$true] %s69
      %72 = dma.hbm_to_vmem [thread:$0]  %s4, 64, %s70, [#allocation9]
    $region21: #{mlp_forward.1} parent=1 // pred_fallthru
      _
    // Predicated region
    $region22: #{mlp_forward.1} parent=1 // pred_check
      _
    $region23: #{mlp_forward.1} parent=1 // pred_check_branch
      %74 = sbr.rel (0) target = $region25
    $region24: #{mlp_forward.1} parent=1 // pred_region
      %s76 = ssub.s32 4096, 4096
      %77 = vsyncadd [#allocation12], %s76
      %s78 = sshll.u32 [#allocation11], 4
      %s79 = int_to_ptr.vmem [resolvable:$true] %s78
      %84 = dma.hbm_to_vmem [thread:$0]  %s5, 4096, %s79, [#allocation12], 64, 64, 4
    $region25: #{mlp_forward.1} parent=1 // pred_fallthru
      _
    // Predicated region
    $region26: #{mlp_forward.1} parent=1 // pred_check
      _
    $region27: #{mlp_forward.1} parent=1 // pred_check_branch
      %86 = sbr.rel (0) target = $region29
    $region28: #{mlp_forward.1} parent=1 // pred_region
      %s88 = ssub.s32 16, 16
      %89 = vsyncadd [#allocation12], %s88
      %s91 = sshll.u32 [#allocation13], 4
      %s92 = int_to_ptr.vmem [resolvable:$true] %s91
      %94 = dma.hbm_to_vmem [thread:$0]  %s6, 16, %s92, [#allocation12]
    $region29: #{mlp_forward.1} parent=1 // pred_fallthru
      _
    // Predicated region
    $region30: #{mlp_forward.1} parent=1 // pred_check
      _
    $region31: #{mlp_forward.1} parent=1 // pred_check_branch
      %96 = sbr.rel (0) target = $region33
    $region32: #{mlp_forward.1} parent=1 // pred_region
      %97 = dma.done [#allocation3], 1792
    $region33: #{mlp_forward.1} parent=1 // pred_fallthru
      _
    // Predicated region
    $region34: #{mlp_forward.1} parent=1 // pred_check
      _
    $region35: #{mlp_forward.1} parent=1 // pred_check_branch
      %99 = sbr.rel (0) target = $region37
    $region36: #{mlp_forward.1} parent=1 // pred_region
      %100 = dma.done [#allocation6], 25088
    $region37: #{mlp_forward.1} parent=1 // pred_fallthru
      _
    // Predicated region
    $region38: #{mlp_forward.1} parent=1 // pred_check
      _
    $region39: #{mlp_forward.1} parent=1 // pred_check_branch
      %102 = sbr.rel (0) target = $region41
    $region40: #{mlp_forward.1} parent=1 // pred_region
      %103 = dma.done [#allocation6], 64
    $region41: #{mlp_forward.1} parent=1 // pred_fallthru
      _
    // Predicated region
    $region42: #{mlp_forward.1} parent=1 // pred_check
      _
    $region43: #{mlp_forward.1} parent=1 // pred_check_branch
      %105 = sbr.rel (0) target = $region45
    $region44: #{mlp_forward.1} parent=1 // pred_region
      %106 = dma.done [#allocation9], 16384
    $region45: #{mlp_forward.1} parent=1 // pred_fallthru
      _
    // Predicated region
    $region46: #{mlp_forward.1} parent=1 // pred_check
      _
    $region47: #{mlp_forward.1} parent=1 // pred_check_branch
      %108 = sbr.rel (0) target = $region49
    $region48: #{mlp_forward.1} parent=1 // pred_region
      %109 = dma.done [#allocation9], 64
    $region49: #{mlp_forward.1} parent=1 // pred_fallthru
      _
    // Predicated region
    $region50: #{mlp_forward.1} parent=1 // pred_check
      _
    $region51: #{mlp_forward.1} parent=1 // pred_check_branch
      %111 = sbr.rel (0) target = $region53
    $region52: #{mlp_forward.1} parent=1 // pred_region
      %112 = dma.done [#allocation12], 4096
    $region53: #{mlp_forward.1} parent=1 // pred_fallthru
      _
    // Predicated region
    $region54: #{mlp_forward.1} parent=1 // pred_check
      _
    $region55: #{mlp_forward.1} parent=1 // pred_check_branch
      %114 = sbr.rel (0) target = $region57
    $region56: #{mlp_forward.1} parent=1 // pred_region
      %115 = dma.done [#allocation12], 16
    $region57: #{mlp_forward.1} parent=1 // pred_fallthru
      _
    %v117 = vld [vmem:[#allocation2] sm:$0xff]
    %v118 = vld [vmem:[#allocation2 + $0x8] sm:$0xff]
    %v119 = vld [vmem:[#allocation2 + $0x10] sm:$0xff]
    %v120 = vld [vmem:[#allocation2 + $0x18] sm:$0xff]
    %v121 = vld [vmem:[#allocation2 + $0x20] sm:$0xff]
    %v122 = vld [vmem:[#allocation2 + $0x28] sm:$0xff]
    %v123 = vld [vmem:[#allocation2 + $0x30] sm:$0xff]
    %v124 = vld [vmem:[#allocation2 + $0x38] sm:$0xff]
    %v125 = vld [vmem:[#allocation2 + $0x40] sm:$0xff]
    %v126 = vld [vmem:[#allocation2 + $0x48] sm:$0xff]
    %v127 = vld [vmem:[#allocation2 + $0x50] sm:$0xff]
    %v128 = vld [vmem:[#allocation2 + $0x58] sm:$0xff]
    %v129 = vld [vmem:[#allocation2 + $0x60] sm:$0xff]
    %v130 = vld [vmem:[#allocation2 + $0x68] sm:$0xff]
    %v131 = vpack.c.bf16 %v124, %v117
    %v132 = vpack.c.bf16 %v125, %v118
    %v133 = vpack.c.bf16 %v126, %v119
    %v134 = vpack.c.bf16 %v127, %v120
    %v135 = vpack.c.bf16 %v128, %v121
    %v136 = vpack.c.bf16 %v129, %v122
    %v137 = vpack.c.bf16 %v130, %v123
    %v138 = vld [vmem:[#allocation5] sm:$0xff]
    %v139 = vld [vmem:[#allocation5 + $0x8] sm:$0xff]
    %v140 = vld [vmem:[#allocation5 + $0x10] sm:$0xff]
    %v141 = vld [vmem:[#allocation5 + $0x18] sm:$0xff]
    %v142 = vld [vmem:[#allocation5 + $0x20] sm:$0xff]
    %v143 = vld [vmem:[#allocation5 + $0x28] sm:$0xff]
    %v144 = vld [vmem:[#allocation5 + $0x30] sm:$0xff]
    %v145 = vld [vmem:[#allocation5 + $0x38] sm:$0xff]
    %v146 = vld [vmem:[#allocation5 + $0x40] sm:$0xff]
    %v147 = vld [vmem:[#allocation5 + $0x48] sm:$0xff]
    %v148 = vld [vmem:[#allocation5 + $0x50] sm:$0xff]
    %v149 = vld [vmem:[#allocation5 + $0x58] sm:$0xff]
    %v150 = vld [vmem:[#allocation5 + $0x60] sm:$0xff]
    %v151 = vld [vmem:[#allocation5 + $0x68] sm:$0xff]
    %v152 = vld [vmem:[#allocation5 + $0x70] sm:$0xff]
    %v153 = vld [vmem:[#allocation5 + $0x78] sm:$0xff]
    %v154 = vld [vmem:[#allocation5 + $0x80] sm:$0xff]
    %v155 = vld [vmem:[#allocation5 + $0x88] sm:$0xff]
    %v156 = vld [vmem:[#allocation5 + $0x90] sm:$0xff]
    %v157 = vld [vmem:[#allocation5 + $0x98] sm:$0xff]
    %v158 = vld [vmem:[#allocation5 + $0xa0] sm:$0xff]
    %v159 = vld [vmem:[#allocation5 + $0xa8] sm:$0xff]
    %v160 = vld [vmem:[#allocation5 + $0xb0] sm:$0xff]
    %v161 = vld [vmem:[#allocation5 + $0xb8] sm:$0xff]
    %v162 = vld [vmem:[#allocation5 + $0xc0] sm:$0xff]
    %v163 = vld [vmem:[#allocation5 + $0xc8] sm:$0xff]
    %v164 = vld [vmem:[#allocation5 + $0xd0] sm:$0xff]
    %v165 = vld [vmem:[#allocation5 + $0xd8] sm:$0xff]
    %v166 = vld [vmem:[#allocation5 + $0xe0] sm:$0xff]
    %v167 = vld [vmem:[#allocation5 + $0xe8] sm:$0xff]
    %v168 = vld [vmem:[#allocation5 + $0xf0] sm:$0xff]
    %v169 = vld [vmem:[#allocation5 + $0xf8] sm:$0xff]
    %v170 = vld [vmem:[#allocation5 + $0x100] sm:$0xff]
    %v171 = vld [vmem:[#allocation5 + $0x108] sm:$0xff]
    %v172 = vld [vmem:[#allocation5 + $0x110] sm:$0xff]
    %v173 = vld [vmem:[#allocation5 + $0x118] sm:$0xff]
    %v174 = vld [vmem:[#allocation5 + $0x120] sm:$0xff]
    %v175 = vld [vmem:[#allocation5 + $0x128] sm:$0xff]
    %v176 = vld [vmem:[#allocation5 + $0x130] sm:$0xff]
    %v177 = vld [vmem:[#allocation5 + $0x138] sm:$0xff]
    %v178 = vld [vmem:[#allocation5 + $0x140] sm:$0xff]
    %v179 = vld [vmem:[#allocation5 + $0x148] sm:$0xff]
    %v180 = vld [vmem:[#allocation5 + $0x150] sm:$0xff]
    %v181 = vld [vmem:[#allocation5 + $0x158] sm:$0xff]
    %v182 = vld [vmem:[#allocation5 + $0x160] sm:$0xff]
    %v183 = vld [vmem:[#allocation5 + $0x168] sm:$0xff]
    %v184 = vld [vmem:[#allocation5 + $0x170] sm:$0xff]
    %v185 = vld [vmem:[#allocation5 + $0x178] sm:$0xff]
    %v186 = vld [vmem:[#allocation5 + $0x180] sm:$0xff]
    %v187 = vld [vmem:[#allocation5 + $0x188] sm:$0xff]
    %v188 = vld [vmem:[#allocation5 + $0x190] sm:$0xff]
    %v189 = vld [vmem:[#allocation5 + $0x198] sm:$0xff]
    %v190 = vld [vmem:[#allocation5 + $0x1a0] sm:$0xff]
    %v191 = vld [vmem:[#allocation5 + $0x1a8] sm:$0xff]
    %v192 = vld [vmem:[#allocation5 + $0x1b0] sm:$0xff]
    %v193 = vld [vmem:[#allocation5 + $0x1b8] sm:$0xff]
    %v194 = vld [vmem:[#allocation5 + $0x1c0] sm:$0xff]
    %v195 = vld [vmem:[#allocation5 + $0x1c8] sm:$0xff]
    %v196 = vld [vmem:[#allocation5 + $0x1d0] sm:$0xff]
    %v197 = vld [vmem:[#allocation5 + $0x1d8] sm:$0xff]
    %v198 = vld [vmem:[#allocation5 + $0x1e0] sm:$0xff]
    %v199 = vld [vmem:[#allocation5 + $0x1e8] sm:$0xff]
    %v200 = vld [vmem:[#allocation5 + $0x1f0] sm:$0xff]
    %v201 = vld [vmem:[#allocation5 + $0x1f8] sm:$0xff]
    %v202 = vld [vmem:[#allocation5 + $0x200] sm:$0xff]
    %v203 = vld [vmem:[#allocation5 + $0x208] sm:$0xff]
    %v204 = vld [vmem:[#allocation5 + $0x210] sm:$0xff]
    %v205 = vld [vmem:[#allocation5 + $0x218] sm:$0xff]
    %v206 = vld [vmem:[#allocation5 + $0x220] sm:$0xff]
    %v207 = vld [vmem:[#allocation5 + $0x228] sm:$0xff]
    %v208 = vld [vmem:[#allocation5 + $0x230] sm:$0xff]
    %v209 = vld [vmem:[#allocation5 + $0x238] sm:$0xff]
    %v210 = vld [vmem:[#allocation5 + $0x240] sm:$0xff]
    %v211 = vld [vmem:[#allocation5 + $0x248] sm:$0xff]
    %v212 = vld [vmem:[#allocation5 + $0x250] sm:$0xff]
    %v213 = vld [vmem:[#allocation5 + $0x258] sm:$0xff]
    %v214 = vld [vmem:[#allocation5 + $0x260] sm:$0xff]
    %v215 = vld [vmem:[#allocation5 + $0x268] sm:$0xff]
    %v216 = vld [vmem:[#allocation5 + $0x270] sm:$0xff]
    %v217 = vld [vmem:[#allocation5 + $0x278] sm:$0xff]
    %v218 = vld [vmem:[#allocation5 + $0x280] sm:$0xff]
    %v219 = vld [vmem:[#allocation5 + $0x288] sm:$0xff]
    %v220 = vld [vmem:[#allocation5 + $0x290] sm:$0xff]
    %v221 = vld [vmem:[#allocation5 + $0x298] sm:$0xff]
    %v222 = vld [vmem:[#allocation5 + $0x2a0] sm:$0xff]
    %v223 = vld [vmem:[#allocation5 + $0x2a8] sm:$0xff]
    %v224 = vld [vmem:[#allocation5 + $0x2b0] sm:$0xff]
    %v225 = vld [vmem:[#allocation5 + $0x2b8] sm:$0xff]
    %v226 = vld [vmem:[#allocation5 + $0x2c0] sm:$0xff]
    %v227 = vld [vmem:[#allocation5 + $0x2c8] sm:$0xff]
    %v228 = vld [vmem:[#allocation5 + $0x2d0] sm:$0xff]
    %v229 = vld [vmem:[#allocation5 + $0x2d8] sm:$0xff]
    %v230 = vld [vmem:[#allocation5 + $0x2e0] sm:$0xff]
    %v231 = vld [vmem:[#allocation5 + $0x2e8] sm:$0xff]
    %v232 = vld [vmem:[#allocation5 + $0x2f0] sm:$0xff]
    %v233 = vld [vmem:[#allocation5 + $0x2f8] sm:$0xff]
    %v234 = vld [vmem:[#allocation5 + $0x300] sm:$0xff]
    %v235 = vld [vmem:[#allocation5 + $0x308] sm:$0xff]
    %v236 = vld [vmem:[#allocation5 + $0x310] sm:$0xff]
    %v237 = vld [vmem:[#allocation5 + $0x318] sm:$0xff]
    %v238 = vld [vmem:[#allocation5 + $0x320] sm:$0xff]
    %v239 = vld [vmem:[#allocation5 + $0x328] sm:$0xff]
    %v240 = vld [vmem:[#allocation5 + $0x330] sm:$0xff]
    %v241 = vld [vmem:[#allocation5 + $0x338] sm:$0xff]
    %v242 = vld [vmem:[#allocation5 + $0x340] sm:$0xff]
    %v243 = vld [vmem:[#allocation5 + $0x348] sm:$0xff]
    %v244 = vld [vmem:[#allocation5 + $0x350] sm:$0xff]
    %v245 = vld [vmem:[#allocation5 + $0x358] sm:$0xff]
    %v246 = vld [vmem:[#allocation5 + $0x360] sm:$0xff]
    %v247 = vld [vmem:[#allocation5 + $0x368] sm:$0xff]
    %v248 = vld [vmem:[#allocation5 + $0x370] sm:$0xff]
    %v249 = vld [vmem:[#allocation5 + $0x378] sm:$0xff]
    %v250 = vld [vmem:[#allocation5 + $0x380] sm:$0xff]
    %v251 = vld [vmem:[#allocation5 + $0x388] sm:$0xff]
    %v252 = vld [vmem:[#allocation5 + $0x390] sm:$0xff]
    %v253 = vld [vmem:[#allocation5 + $0x398] sm:$0xff]
    %v254 = vld [vmem:[#allocation5 + $0x3a0] sm:$0xff]
    %v255 = vld [vmem:[#allocation5 + $0x3a8] sm:$0xff]
    %v256 = vld [vmem:[#allocation5 + $0x3b0] sm:$0xff]
    %v257 = vld [vmem:[#allocation5 + $0x3b8] sm:$0xff]
    %v258 = vld [vmem:[#allocation5 + $0x3c0] sm:$0xff]
    %v259 = vld [vmem:[#allocation5 + $0x3c8] sm:$0xff]
    %v260 = vld [vmem:[#allocation5 + $0x3d0] sm:$0xff]
    %v261 = vld [vmem:[#allocation5 + $0x3d8] sm:$0xff]
    %v262 = vld [vmem:[#allocation5 + $0x3e0] sm:$0xff]
    %v263 = vld [vmem:[#allocation5 + $0x3e8] sm:$0xff]
    %v264 = vld [vmem:[#allocation5 + $0x3f0] sm:$0xff]
    %v265 = vld [vmem:[#allocation5 + $0x3f8] sm:$0xff]
    %v266 = vld [vmem:[#allocation5 + $0x400] sm:$0xff]
    %v267 = vld [vmem:[#allocation5 + $0x408] sm:$0xff]
    %v268 = vld [vmem:[#allocation5 + $0x410] sm:$0xff]
    %v269 = vld [vmem:[#allocation5 + $0x418] sm:$0xff]
    %v270 = vld [vmem:[#allocation5 + $0x420] sm:$0xff]
    %v271 = vld [vmem:[#allocation5 + $0x428] sm:$0xff]
    %v272 = vld [vmem:[#allocation5 + $0x430] sm:$0xff]
    %v273 = vld [vmem:[#allocation5 + $0x438] sm:$0xff]
    %v274 = vld [vmem:[#allocation5 + $0x440] sm:$0xff]
    %v275 = vld [vmem:[#allocation5 + $0x448] sm:$0xff]
    %v276 = vld [vmem:[#allocation5 + $0x450] sm:$0xff]
    %v277 = vld [vmem:[#allocation5 + $0x458] sm:$0xff]
    %v278 = vld [vmem:[#allocation5 + $0x460] sm:$0xff]
    %v279 = vld [vmem:[#allocation5 + $0x468] sm:$0xff]
    %v280 = vld [vmem:[#allocation5 + $0x470] sm:$0xff]
    %v281 = vld [vmem:[#allocation5 + $0x478] sm:$0xff]
    %v282 = vld [vmem:[#allocation5 + $0x480] sm:$0xff]
    %v283 = vld [vmem:[#allocation5 + $0x488] sm:$0xff]
    %v284 = vld [vmem:[#allocation5 + $0x490] sm:$0xff]
    %v285 = vld [vmem:[#allocation5 + $0x498] sm:$0xff]
    %v286 = vld [vmem:[#allocation5 + $0x4a0] sm:$0xff]
    %v287 = vld [vmem:[#allocation5 + $0x4a8] sm:$0xff]
    %v288 = vld [vmem:[#allocation5 + $0x4b0] sm:$0xff]
    %v289 = vld [vmem:[#allocation5 + $0x4b8] sm:$0xff]
    %v290 = vld [vmem:[#allocation5 + $0x4c0] sm:$0xff]
    %v291 = vld [vmem:[#allocation5 + $0x4c8] sm:$0xff]
    %v292 = vld [vmem:[#allocation5 + $0x4d0] sm:$0xff]
    %v293 = vld [vmem:[#allocation5 + $0x4d8] sm:$0xff]
    %v294 = vld [vmem:[#allocation5 + $0x4e0] sm:$0xff]
    %v295 = vld [vmem:[#allocation5 + $0x4e8] sm:$0xff]
    %v296 = vld [vmem:[#allocation5 + $0x4f0] sm:$0xff]
    %v297 = vld [vmem:[#allocation5 + $0x4f8] sm:$0xff]
    %v298 = vld [vmem:[#allocation5 + $0x500] sm:$0xff]
    %v299 = vld [vmem:[#allocation5 + $0x508] sm:$0xff]
    %v300 = vld [vmem:[#allocation5 + $0x510] sm:$0xff]
    %v301 = vld [vmem:[#allocation5 + $0x518] sm:$0xff]
    %v302 = vld [vmem:[#allocation5 + $0x520] sm:$0xff]
    %v303 = vld [vmem:[#allocation5 + $0x528] sm:$0xff]
    %v304 = vld [vmem:[#allocation5 + $0x530] sm:$0xff]
    %v305 = vld [vmem:[#allocation5 + $0x538] sm:$0xff]
    %v306 = vld [vmem:[#allocation5 + $0x540] sm:$0xff]
    %v307 = vld [vmem:[#allocation5 + $0x548] sm:$0xff]
    %v308 = vld [vmem:[#allocation5 + $0x550] sm:$0xff]
    %v309 = vld [vmem:[#allocation5 + $0x558] sm:$0xff]
    %v310 = vld [vmem:[#allocation5 + $0x560] sm:$0xff]
    %v311 = vld [vmem:[#allocation5 + $0x568] sm:$0xff]
    %v312 = vld [vmem:[#allocation5 + $0x570] sm:$0xff]
    %v313 = vld [vmem:[#allocation5 + $0x578] sm:$0xff]
    %v314 = vld [vmem:[#allocation5 + $0x580] sm:$0xff]
    %v315 = vld [vmem:[#allocation5 + $0x588] sm:$0xff]
    %v316 = vld [vmem:[#allocation5 + $0x590] sm:$0xff]
    %v317 = vld [vmem:[#allocation5 + $0x598] sm:$0xff]
    %v318 = vld [vmem:[#allocation5 + $0x5a0] sm:$0xff]
    %v319 = vld [vmem:[#allocation5 + $0x5a8] sm:$0xff]
    %v320 = vld [vmem:[#allocation5 + $0x5b0] sm:$0xff]
    %v321 = vld [vmem:[#allocation5 + $0x5b8] sm:$0xff]
    %v322 = vld [vmem:[#allocation5 + $0x5c0] sm:$0xff]
    %v323 = vld [vmem:[#allocation5 + $0x5c8] sm:$0xff]
    %v324 = vld [vmem:[#allocation5 + $0x5d0] sm:$0xff]
    %v325 = vld [vmem:[#allocation5 + $0x5d8] sm:$0xff]
    %v326 = vld [vmem:[#allocation5 + $0x5e0] sm:$0xff]
    %v327 = vld [vmem:[#allocation5 + $0x5e8] sm:$0xff]
    %v328 = vld [vmem:[#allocation5 + $0x5f0] sm:$0xff]
    %v329 = vld [vmem:[#allocation5 + $0x5f8] sm:$0xff]
    %v330 = vld [vmem:[#allocation5 + $0x600] sm:$0xff]
    %v331 = vld [vmem:[#allocation5 + $0x608] sm:$0xff]
    %v332 = vld [vmem:[#allocation5 + $0x610] sm:$0xff]
    %v333 = vld [vmem:[#allocation5 + $0x618] sm:$0xff]
    %v334 = vld [vmem:[#allocation7] sm:$0xf]
    %v336 = vlaneseq
    %v337 = vshrl.u32 %v336, 7
    %v338 = vsub.s32 0, %v337
    %v339 = vrot.slane %v334, %v338
    %v340 = vlaneseq
    %v341 = vshrl.u32 %v340, 7
    %v342 = vsub.s32 1, %v341
    %v343 = vrot.slane %v334, %v342
    %v344 = vlaneseq
    %v345 = vshrl.u32 %v344, 7
    %v346 = vsub.s32 2, %v345
    %v347 = vrot.slane %v334, %v346
    %v348 = vlaneseq
    %v349 = vshrl.u32 %v348, 7
    %v350 = vsub.s32 3, %v349
    %v351 = vrot.slane %v334, %v350
    %v552 = vunpack.c.l.b16 %v138
    %v553 = vunpack.c.h.b16 %v138
    %v554 = vunpack.c.l.b16 %v139
    %v555 = vunpack.c.h.b16 %v139
    %v556 = vunpack.c.l.b16 %v140
    %v557 = vunpack.c.h.b16 %v140
    %v558 = vunpack.c.l.b16 %v141
    %v559 = vunpack.c.h.b16 %v141
    %v560 = vunpack.c.l.b16 %v142
    %v561 = vunpack.c.h.b16 %v142
    %v562 = vunpack.c.l.b16 %v143
    %v563 = vunpack.c.h.b16 %v143
    %v564 = vunpack.c.l.b16 %v144
    %v565 = vunpack.c.h.b16 %v144
    %v566 = vunpack.c.l.b16 %v145
    %v567 = vunpack.c.h.b16 %v145
    %v568 = vunpack.c.l.b16 %v146
    %v569 = vunpack.c.h.b16 %v146
    %v570 = vunpack.c.l.b16 %v147
    %v571 = vunpack.c.h.b16 %v147
    %v572 = vunpack.c.l.b16 %v148
    %v573 = vunpack.c.h.b16 %v148
    %v574 = vunpack.c.l.b16 %v149
    %v575 = vunpack.c.h.b16 %v149
    %v576 = vunpack.c.l.b16 %v150
    %v577 = vunpack.c.h.b16 %v150
    %v578 = vunpack.c.l.b16 %v151
    %v579 = vunpack.c.h.b16 %v151
    %v580 = vunpack.c.l.b16 %v152
    %v581 = vunpack.c.h.b16 %v152
    %v582 = vunpack.c.l.b16 %v153
    %v583 = vunpack.c.h.b16 %v153
    %v584 = vunpack.c.l.b16 %v154
    %v585 = vunpack.c.h.b16 %v154
    %v586 = vunpack.c.l.b16 %v155
    %v587 = vunpack.c.h.b16 %v155
    %v588 = vunpack.c.l.b16 %v156
    %v589 = vunpack.c.h.b16 %v156
    %v590 = vunpack.c.l.b16 %v157
    %v591 = vunpack.c.h.b16 %v157
    %v592 = vunpack.c.l.b16 %v158
    %v593 = vunpack.c.h.b16 %v158
    %v594 = vunpack.c.l.b16 %v159
    %v595 = vunpack.c.h.b16 %v159
    %v596 = vunpack.c.l.b16 %v160
    %v597 = vunpack.c.h.b16 %v160
    %v598 = vunpack.c.l.b16 %v161
    %v599 = vunpack.c.h.b16 %v161
    %v600 = vunpack.c.l.b16 %v162
    %v601 = vunpack.c.h.b16 %v162
    %v602 = vunpack.c.l.b16 %v163
    %v603 = vunpack.c.h.b16 %v163
    %v604 = vunpack.c.l.b16 %v164
    %v605 = vunpack.c.h.b16 %v164
    %v606 = vunpack.c.l.b16 %v165
    %v607 = vunpack.c.h.b16 %v165
    %v608 = vunpack.c.l.b16 %v166
    %v609 = vunpack.c.h.b16 %v166
    %v610 = vunpack.c.l.b16 %v167
    %v611 = vunpack.c.h.b16 %v167
    %v612 = vunpack.c.l.b16 %v168
    %v613 = vunpack.c.h.b16 %v168
    %v614 = vunpack.c.l.b16 %v169
    %v615 = vunpack.c.h.b16 %v169
    %v616 = vunpack.c.l.b16 %v170
    %v617 = vunpack.c.h.b16 %v170
    %v618 = vunpack.c.l.b16 %v171
    %v619 = vunpack.c.h.b16 %v171
    %v620 = vunpack.c.l.b16 %v172
    %v621 = vunpack.c.h.b16 %v172
    %v622 = vunpack.c.l.b16 %v173
    %v623 = vunpack.c.h.b16 %v173
    %v624 = vunpack.c.l.b16 %v174
    %v625 = vunpack.c.h.b16 %v174
    %v626 = vunpack.c.l.b16 %v175
    %v627 = vunpack.c.h.b16 %v175
    %v628 = vunpack.c.l.b16 %v176
    %v629 = vunpack.c.h.b16 %v176
    %v630 = vunpack.c.l.b16 %v177
    %v631 = vunpack.c.h.b16 %v177
    %v632 = vunpack.c.l.b16 %v178
    %v633 = vunpack.c.h.b16 %v178
    %v634 = vunpack.c.l.b16 %v179
    %v635 = vunpack.c.h.b16 %v179
    %v636 = vunpack.c.l.b16 %v180
    %v637 = vunpack.c.h.b16 %v180
    %v638 = vunpack.c.l.b16 %v181
    %v639 = vunpack.c.h.b16 %v181
    %v640 = vunpack.c.l.b16 %v182
    %v641 = vunpack.c.h.b16 %v182
    %v642 = vunpack.c.l.b16 %v183
    %v643 = vunpack.c.h.b16 %v183
    %v644 = vunpack.c.l.b16 %v184
    %v645 = vunpack.c.h.b16 %v184
    %v646 = vunpack.c.l.b16 %v185
    %v647 = vunpack.c.h.b16 %v185
    %v648 = vunpack.c.l.b16 %v186
    %v649 = vunpack.c.h.b16 %v186
    %v650 = vunpack.c.l.b16 %v187
    %v651 = vunpack.c.h.b16 %v187
    %v652 = vunpack.c.l.b16 %v188
    %v653 = vunpack.c.h.b16 %v188
    %v654 = vunpack.c.l.b16 %v189
    %v655 = vunpack.c.h.b16 %v189
    %v656 = vunpack.c.l.b16 %v190
    %v657 = vunpack.c.h.b16 %v190
    %v658 = vunpack.c.l.b16 %v191
    %v659 = vunpack.c.h.b16 %v191
    %v660 = vunpack.c.l.b16 %v192
    %v661 = vunpack.c.h.b16 %v192
    %v662 = vunpack.c.l.b16 %v193
    %v663 = vunpack.c.h.b16 %v193
    %v664 = vunpack.c.l.b16 %v194
    %v665 = vunpack.c.h.b16 %v194
    %v666 = vunpack.c.l.b16 %v195
    %v667 = vunpack.c.h.b16 %v195
    %v668 = vunpack.c.l.b16 %v196
    %v669 = vunpack.c.h.b16 %v196
    %v670 = vunpack.c.l.b16 %v197
    %v671 = vunpack.c.h.b16 %v197
    %v672 = vunpack.c.l.b16 %v198
    %v673 = vunpack.c.h.b16 %v198
    %v674 = vunpack.c.l.b16 %v199
    %v675 = vunpack.c.h.b16 %v199
    %v676 = vunpack.c.l.b16 %v200
    %v677 = vunpack.c.h.b16 %v200
    %v678 = vunpack.c.l.b16 %v201
    %v679 = vunpack.c.h.b16 %v201
    %v680 = vunpack.c.l.b16 %v202
    %v681 = vunpack.c.h.b16 %v202
    %v682 = vunpack.c.l.b16 %v203
    %v683 = vunpack.c.h.b16 %v203
    %v684 = vunpack.c.l.b16 %v204
    %v685 = vunpack.c.h.b16 %v204
    %v686 = vunpack.c.l.b16 %v205
    %v687 = vunpack.c.h.b16 %v205
    %v688 = vunpack.c.l.b16 %v206
    %v689 = vunpack.c.h.b16 %v206
    %v690 = vunpack.c.l.b16 %v207
    %v691 = vunpack.c.h.b16 %v207
    %v692 = vunpack.c.l.b16 %v208
    %v693 = vunpack.c.h.b16 %v208
    %v694 = vunpack.c.l.b16 %v209
    %v695 = vunpack.c.h.b16 %v209
    %v696 = vunpack.c.l.b16 %v210
    %v697 = vunpack.c.h.b16 %v210
    %v698 = vunpack.c.l.b16 %v211
    %v699 = vunpack.c.h.b16 %v211
    %v700 = vunpack.c.l.b16 %v212
    %v701 = vunpack.c.h.b16 %v212
    %v702 = vunpack.c.l.b16 %v213
    %v703 = vunpack.c.h.b16 %v213
    %v704 = vunpack.c.l.b16 %v214
    %v705 = vunpack.c.h.b16 %v214
    %v706 = vunpack.c.l.b16 %v215
    %v707 = vunpack.c.h.b16 %v215
    %v708 = vunpack.c.l.b16 %v216
    %v709 = vunpack.c.h.b16 %v216
    %v710 = vunpack.c.l.b16 %v217
    %v711 = vunpack.c.h.b16 %v217
    %v712 = vunpack.c.l.b16 %v218
    %v713 = vunpack.c.h.b16 %v218
    %v714 = vunpack.c.l.b16 %v219
    %v715 = vunpack.c.h.b16 %v219
    %v716 = vunpack.c.l.b16 %v220
    %v717 = vunpack.c.h.b16 %v220
    %v718 = vunpack.c.l.b16 %v221
    %v719 = vunpack.c.h.b16 %v221
    %v720 = vunpack.c.l.b16 %v222
    %v721 = vunpack.c.h.b16 %v222
    %v722 = vunpack.c.l.b16 %v223
    %v723 = vunpack.c.h.b16 %v223
    %v724 = vunpack.c.l.b16 %v224
    %v725 = vunpack.c.h.b16 %v224
    %v726 = vunpack.c.l.b16 %v225
    %v727 = vunpack.c.h.b16 %v225
    %v728 = vunpack.c.l.b16 %v226
    %v729 = vunpack.c.h.b16 %v226
    %v730 = vunpack.c.l.b16 %v227
    %v731 = vunpack.c.h.b16 %v227
    %v732 = vunpack.c.l.b16 %v228
    %v733 = vunpack.c.h.b16 %v228
    %v734 = vunpack.c.l.b16 %v229
    %v735 = vunpack.c.h.b16 %v229
    %v736 = vunpack.c.l.b16 %v230
    %v737 = vunpack.c.h.b16 %v230
    %v738 = vunpack.c.l.b16 %v231
    %v739 = vunpack.c.h.b16 %v231
    %v740 = vunpack.c.l.b16 %v232
    %v741 = vunpack.c.h.b16 %v232
    %v742 = vunpack.c.l.b16 %v233
    %v743 = vunpack.c.h.b16 %v233
    %v744 = vunpack.c.l.b16 %v234
    %v745 = vunpack.c.h.b16 %v234
    %v746 = vunpack.c.l.b16 %v235
    %v747 = vunpack.c.h.b16 %v235
    %v748 = vunpack.c.l.b16 %v236
    %v749 = vunpack.c.h.b16 %v236
    %v750 = vunpack.c.l.b16 %v237
    %v751 = vunpack.c.h.b16 %v237
    %v752 = vunpack.c.l.b16 %v238
    %v753 = vunpack.c.h.b16 %v238
    %v754 = vunpack.c.l.b16 %v239
    %v755 = vunpack.c.h.b16 %v239
    %v756 = vunpack.c.l.b16 %v240
    %v757 = vunpack.c.h.b16 %v240
    %v758 = vunpack.c.l.b16 %v241
    %v759 = vunpack.c.h.b16 %v241
    %v760 = vunpack.c.l.b16 %v242
    %v761 = vunpack.c.h.b16 %v242
    %v762 = vunpack.c.l.b16 %v243
    %v763 = vunpack.c.h.b16 %v243
    %v764 = vunpack.c.l.b16 %v244
    %v765 = vunpack.c.h.b16 %v244
    %v766 = vunpack.c.l.b16 %v245
    %v767 = vunpack.c.h.b16 %v245
    %v768 = vunpack.c.l.b16 %v246
    %v769 = vunpack.c.h.b16 %v246
    %v770 = vunpack.c.l.b16 %v247
    %v771 = vunpack.c.h.b16 %v247
    %v772 = vunpack.c.l.b16 %v248
    %v773 = vunpack.c.h.b16 %v248
    %v774 = vunpack.c.l.b16 %v249
    %v775 = vunpack.c.h.b16 %v249
    %v776 = vunpack.c.l.b16 %v250
    %v777 = vunpack.c.h.b16 %v250
    %v778 = vunpack.c.l.b16 %v251
    %v779 = vunpack.c.h.b16 %v251
    %v780 = vunpack.c.l.b16 %v252
    %v781 = vunpack.c.h.b16 %v252
    %v782 = vunpack.c.l.b16 %v253
    %v783 = vunpack.c.h.b16 %v253
    %v784 = vunpack.c.l.b16 %v254
    %v785 = vunpack.c.h.b16 %v254
    %v786 = vunpack.c.l.b16 %v255
    %v787 = vunpack.c.h.b16 %v255
    %v788 = vunpack.c.l.b16 %v256
    %v789 = vunpack.c.h.b16 %v256
    %v790 = vunpack.c.l.b16 %v257
    %v791 = vunpack.c.h.b16 %v257
    %v792 = vunpack.c.l.b16 %v258
    %v793 = vunpack.c.h.b16 %v258
    %v794 = vunpack.c.l.b16 %v259
    %v795 = vunpack.c.h.b16 %v259
    %v796 = vunpack.c.l.b16 %v260
    %v797 = vunpack.c.h.b16 %v260
    %v798 = vunpack.c.l.b16 %v261
    %v799 = vunpack.c.h.b16 %v261
    %v800 = vunpack.c.l.b16 %v262
    %v801 = vunpack.c.h.b16 %v262
    %v802 = vunpack.c.l.b16 %v263
    %v803 = vunpack.c.h.b16 %v263
    %v804 = vunpack.c.l.b16 %v264
    %v805 = vunpack.c.h.b16 %v264
    %v806 = vunpack.c.l.b16 %v265
    %v807 = vunpack.c.h.b16 %v265
    %v808 = vunpack.c.l.b16 %v266
    %v809 = vunpack.c.h.b16 %v266
    %v810 = vunpack.c.l.b16 %v267
    %v811 = vunpack.c.h.b16 %v267
    %v812 = vunpack.c.l.b16 %v268
    %v813 = vunpack.c.h.b16 %v268
    %v814 = vunpack.c.l.b16 %v269
    %v815 = vunpack.c.h.b16 %v269
    %v816 = vunpack.c.l.b16 %v270
    %v817 = vunpack.c.h.b16 %v270
    %v818 = vunpack.c.l.b16 %v271
    %v819 = vunpack.c.h.b16 %v271
    %v820 = vunpack.c.l.b16 %v272
    %v821 = vunpack.c.h.b16 %v272
    %v822 = vunpack.c.l.b16 %v273
    %v823 = vunpack.c.h.b16 %v273
    %v824 = vunpack.c.l.b16 %v274
    %v825 = vunpack.c.h.b16 %v274
    %v826 = vunpack.c.l.b16 %v275
    %v827 = vunpack.c.h.b16 %v275
    %v828 = vunpack.c.l.b16 %v276
    %v829 = vunpack.c.h.b16 %v276
    %v830 = vunpack.c.l.b16 %v277
    %v831 = vunpack.c.h.b16 %v277
    %v832 = vunpack.c.l.b16 %v278
    %v833 = vunpack.c.h.b16 %v278
    %v834 = vunpack.c.l.b16 %v279
    %v835 = vunpack.c.h.b16 %v279
    %v836 = vunpack.c.l.b16 %v280
    %v837 = vunpack.c.h.b16 %v280
    %v838 = vunpack.c.l.b16 %v281
    %v839 = vunpack.c.h.b16 %v281
    %v840 = vunpack.c.l.b16 %v282
    %v841 = vunpack.c.h.b16 %v282
    %v842 = vunpack.c.l.b16 %v283
    %v843 = vunpack.c.h.b16 %v283
    %v844 = vunpack.c.l.b16 %v284
    %v845 = vunpack.c.h.b16 %v284
    %v846 = vunpack.c.l.b16 %v285
    %v847 = vunpack.c.h.b16 %v285
    %v848 = vunpack.c.l.b16 %v286
    %v849 = vunpack.c.h.b16 %v286
    %v850 = vunpack.c.l.b16 %v287
    %v851 = vunpack.c.h.b16 %v287
    %v852 = vunpack.c.l.b16 %v288
    %v853 = vunpack.c.h.b16 %v288
    %v854 = vunpack.c.l.b16 %v289
    %v855 = vunpack.c.h.b16 %v289
    %v856 = vunpack.c.l.b16 %v290
    %v857 = vunpack.c.h.b16 %v290
    %v858 = vunpack.c.l.b16 %v291
    %v859 = vunpack.c.h.b16 %v291
    %v860 = vunpack.c.l.b16 %v292
    %v861 = vunpack.c.h.b16 %v292
    %v862 = vunpack.c.l.b16 %v293
    %v863 = vunpack.c.h.b16 %v293
    %v864 = vunpack.c.l.b16 %v294
    %v865 = vunpack.c.h.b16 %v294
    %v866 = vunpack.c.l.b16 %v295
    %v867 = vunpack.c.h.b16 %v295
    %v868 = vunpack.c.l.b16 %v296
    %v869 = vunpack.c.h.b16 %v296
    %v870 = vunpack.c.l.b16 %v297
    %v871 = vunpack.c.h.b16 %v297
    %v872 = vunpack.c.l.b16 %v298
    %v873 = vunpack.c.h.b16 %v298
    %v874 = vunpack.c.l.b16 %v299
    %v875 = vunpack.c.h.b16 %v299
    %v876 = vunpack.c.l.b16 %v300
    %v877 = vunpack.c.h.b16 %v300
    %v878 = vunpack.c.l.b16 %v301
    %v879 = vunpack.c.h.b16 %v301
    %v880 = vunpack.c.l.b16 %v302
    %v881 = vunpack.c.h.b16 %v302
    %v882 = vunpack.c.l.b16 %v303
    %v883 = vunpack.c.h.b16 %v303
    %v884 = vunpack.c.l.b16 %v304
    %v885 = vunpack.c.h.b16 %v304
    %v886 = vunpack.c.l.b16 %v305
    %v887 = vunpack.c.h.b16 %v305
    %v888 = vunpack.c.l.b16 %v306
    %v889 = vunpack.c.h.b16 %v306
    %v890 = vunpack.c.l.b16 %v307
    %v891 = vunpack.c.h.b16 %v307
    %v892 = vunpack.c.l.b16 %v308
    %v893 = vunpack.c.h.b16 %v308
    %v894 = vunpack.c.l.b16 %v309
    %v895 = vunpack.c.h.b16 %v309
    %v896 = vunpack.c.l.b16 %v310
    %v897 = vunpack.c.h.b16 %v310
    %v898 = vunpack.c.l.b16 %v311
    %v899 = vunpack.c.h.b16 %v311
    %v900 = vunpack.c.l.b16 %v312
    %v901 = vunpack.c.h.b16 %v312
    %v902 = vunpack.c.l.b16 %v313
    %v903 = vunpack.c.h.b16 %v313
    %v904 = vunpack.c.l.b16 %v314
    %v905 = vunpack.c.h.b16 %v314
    %v906 = vunpack.c.l.b16 %v315
    %v907 = vunpack.c.h.b16 %v315
    %v908 = vunpack.c.l.b16 %v316
    %v909 = vunpack.c.h.b16 %v316
    %v910 = vunpack.c.l.b16 %v317
    %v911 = vunpack.c.h.b16 %v317
    %v912 = vunpack.c.l.b16 %v318
    %v913 = vunpack.c.h.b16 %v318
    %v914 = vunpack.c.l.b16 %v319
    %v915 = vunpack.c.h.b16 %v319
    %v916 = vunpack.c.l.b16 %v320
    %v917 = vunpack.c.h.b16 %v320
    %v918 = vunpack.c.l.b16 %v321
    %v919 = vunpack.c.h.b16 %v321
    %v920 = vunpack.c.l.b16 %v322
    %v921 = vunpack.c.h.b16 %v322
    %v922 = vunpack.c.l.b16 %v323
    %v923 = vunpack.c.h.b16 %v323
    %v924 = vunpack.c.l.b16 %v324
    %v925 = vunpack.c.h.b16 %v324
    %v926 = vunpack.c.l.b16 %v325
    %v927 = vunpack.c.h.b16 %v325
    %v928 = vunpack.c.l.b16 %v326
    %v929 = vunpack.c.h.b16 %v326
    %v930 = vunpack.c.l.b16 %v327
    %v931 = vunpack.c.h.b16 %v327
    %v932 = vunpack.c.l.b16 %v328
    %v933 = vunpack.c.h.b16 %v328
    %v934 = vunpack.c.l.b16 %v329
    %v935 = vunpack.c.h.b16 %v329
    %v936 = vunpack.c.l.b16 %v330
    %v937 = vunpack.c.h.b16 %v330
    %v938 = vunpack.c.l.b16 %v331
    %v939 = vunpack.c.h.b16 %v331
    %v940 = vunpack.c.l.b16 %v332
    %v941 = vunpack.c.h.b16 %v332
    %v942 = vunpack.c.l.b16 %v333
    %v943 = vunpack.c.h.b16 %v333
    %v944 = vpack.c.b16 %v556, %v552
    %v945 = vpack.c.b16 %v557, %v553
    %v946 = vpack.c.b16 %v558, %v554
    %v947 = vpack.c.b16 %v559, %v555
    %v948 = vpack.c.b16 %v564, %v560
    %v949 = vpack.c.b16 %v565, %v561
    %v950 = vpack.c.b16 %v566, %v562
    %v951 = vpack.c.b16 %v567, %v563
    %v952 = vpack.c.b16 %v572, %v568
    %v953 = vpack.c.b16 %v573, %v569
    %v954 = vpack.c.b16 %v574, %v570
    %v955 = vpack.c.b16 %v575, %v571
    %v956 = vpack.c.b16 %v580, %v576
    %v957 = vpack.c.b16 %v581, %v577
    %v958 = vpack.c.b16 %v582, %v578
    %v959 = vpack.c.b16 %v583, %v579
    %v960 = vpack.c.b16 %v588, %v584
    %v961 = vpack.c.b16 %v589, %v585
    %v962 = vpack.c.b16 %v590, %v586
    %v963 = vpack.c.b16 %v591, %v587
    %v964 = vpack.c.b16 %v596, %v592
    %v965 = vpack.c.b16 %v597, %v593
    %v966 = vpack.c.b16 %v598, %v594
    %v967 = vpack.c.b16 %v599, %v595
    %v968 = vpack.c.b16 %v604, %v600
    %v969 = vpack.c.b16 %v605, %v601
    %v970 = vpack.c.b16 %v606, %v602
    %v971 = vpack.c.b16 %v607, %v603
    %v972 = vpack.c.b16 %v612, %v608
    %v973 = vpack.c.b16 %v613, %v609
    %v974 = vpack.c.b16 %v614, %v610
    %v975 = vpack.c.b16 %v615, %v611
    %v976 = vpack.c.b16 %v620, %v616
    %v977 = vpack.c.b16 %v621, %v617
    %v978 = vpack.c.b16 %v622, %v618
    %v979 = vpack.c.b16 %v623, %v619
    %v980 = vpack.c.b16 %v628, %v624
    %v981 = vpack.c.b16 %v629, %v625
    %v982 = vpack.c.b16 %v630, %v626
    %v983 = vpack.c.b16 %v631, %v627
    %v984 = vpack.c.b16 %v636, %v632
    %v985 = vpack.c.b16 %v637, %v633
    %v986 = vpack.c.b16 %v638, %v634
    %v987 = vpack.c.b16 %v639, %v635
    %v988 = vpack.c.b16 %v644, %v640
    %v989 = vpack.c.b16 %v645, %v641
    %v990 = vpack.c.b16 %v646, %v642
    %v991 = vpack.c.b16 %v647, %v643
    %v992 = vpack.c.b16 %v652, %v648
    %v993 = vpack.c.b16 %v653, %v649
    %v994 = vpack.c.b16 %v654, %v650
    %v995 = vpack.c.b16 %v655, %v651
    %v996 = vpack.c.b16 %v660, %v656
    %v997 = vpack.c.b16 %v661, %v657
    %v998 = vpack.c.b16 %v662, %v658
    %v999 = vpack.c.b16 %v663, %v659
    %v1000 = vpack.c.b16 %v668, %v664
    %v1001 = vpack.c.b16 %v669, %v665
    %v1002 = vpack.c.b16 %v670, %v666
    %v1003 = vpack.c.b16 %v671, %v667
    %v1004 = vpack.c.b16 %v676, %v672
    %v1005 = vpack.c.b16 %v677, %v673
    %v1006 = vpack.c.b16 %v678, %v674
    %v1007 = vpack.c.b16 %v679, %v675
    %v1008 = vpack.c.b16 %v684, %v680
    %v1009 = vpack.c.b16 %v685, %v681
    %v1010 = vpack.c.b16 %v686, %v682
    %v1011 = vpack.c.b16 %v687, %v683
    %v1012 = vpack.c.b16 %v692, %v688
    %v1013 = vpack.c.b16 %v693, %v689
    %v1014 = vpack.c.b16 %v694, %v690
    %v1015 = vpack.c.b16 %v695, %v691
    %v1016 = vpack.c.b16 %v700, %v696
    %v1017 = vpack.c.b16 %v701, %v697
    %v1018 = vpack.c.b16 %v702, %v698
    %v1019 = vpack.c.b16 %v703, %v699
    %v1020 = vpack.c.b16 %v708, %v704
    %v1021 = vpack.c.b16 %v709, %v705
    %v1022 = vpack.c.b16 %v710, %v706
    %v1023 = vpack.c.b16 %v711, %v707
    %v1024 = vpack.c.b16 %v716, %v712
    %v1025 = vpack.c.b16 %v717, %v713
    %v1026 = vpack.c.b16 %v718, %v714
    %v1027 = vpack.c.b16 %v719, %v715
    %v1028 = vpack.c.b16 %v724, %v720
    %v1029 = vpack.c.b16 %v725, %v721
    %v1030 = vpack.c.b16 %v726, %v722
    %v1031 = vpack.c.b16 %v727, %v723
    %v1032 = vpack.c.b16 %v732, %v728
    %v1033 = vpack.c.b16 %v733, %v729
    %v1034 = vpack.c.b16 %v734, %v730
    %v1035 = vpack.c.b16 %v735, %v731
    %v1036 = vpack.c.b16 %v740, %v736
    %v1037 = vpack.c.b16 %v741, %v737
    %v1038 = vpack.c.b16 %v742, %v738
    %v1039 = vpack.c.b16 %v743, %v739
    %v1040 = vpack.c.b16 %v748, %v744
    %v1041 = vpack.c.b16 %v749, %v745
    %v1042 = vpack.c.b16 %v750, %v746
    %v1043 = vpack.c.b16 %v751, %v747
    %v1044 = vpack.c.b16 %v756, %v752
    %v1045 = vpack.c.b16 %v757, %v753
    %v1046 = vpack.c.b16 %v758, %v754
    %v1047 = vpack.c.b16 %v759, %v755
    %v1048 = vpack.c.b16 %v764, %v760
    %v1049 = vpack.c.b16 %v765, %v761
    %v1050 = vpack.c.b16 %v766, %v762
    %v1051 = vpack.c.b16 %v767, %v763
    %v1052 = vpack.c.b16 %v772, %v768
    %v1053 = vpack.c.b16 %v773, %v769
    %v1054 = vpack.c.b16 %v774, %v770
    %v1055 = vpack.c.b16 %v775, %v771
    %v1056 = vpack.c.b16 %v780, %v776
    %v1057 = vpack.c.b16 %v781, %v777
    %v1058 = vpack.c.b16 %v782, %v778
    %v1059 = vpack.c.b16 %v783, %v779
    %v1060 = vpack.c.b16 %v788, %v784
    %v1061 = vpack.c.b16 %v789, %v785
    %v1062 = vpack.c.b16 %v790, %v786
    %v1063 = vpack.c.b16 %v791, %v787
    %v1064 = vpack.c.b16 %v796, %v792
    %v1065 = vpack.c.b16 %v797, %v793
    %v1066 = vpack.c.b16 %v798, %v794
    %v1067 = vpack.c.b16 %v799, %v795
    %v1068 = vpack.c.b16 %v804, %v800
    %v1069 = vpack.c.b16 %v805, %v801
    %v1070 = vpack.c.b16 %v806, %v802
    %v1071 = vpack.c.b16 %v807, %v803
    %v1072 = vpack.c.b16 %v812, %v808
    %v1073 = vpack.c.b16 %v813, %v809
    %v1074 = vpack.c.b16 %v814, %v810
    %v1075 = vpack.c.b16 %v815, %v811
    %v1076 = vpack.c.b16 %v820, %v816
    %v1077 = vpack.c.b16 %v821, %v817
    %v1078 = vpack.c.b16 %v822, %v818
    %v1079 = vpack.c.b16 %v823, %v819
    %v1080 = vpack.c.b16 %v828, %v824
    %v1081 = vpack.c.b16 %v829, %v825
    %v1082 = vpack.c.b16 %v830, %v826
    %v1083 = vpack.c.b16 %v831, %v827
    %v1084 = vpack.c.b16 %v836, %v832
    %v1085 = vpack.c.b16 %v837, %v833
    %v1086 = vpack.c.b16 %v838, %v834
    %v1087 = vpack.c.b16 %v839, %v835
    %v1088 = vpack.c.b16 %v844, %v840
    %v1089 = vpack.c.b16 %v845, %v841
    %v1090 = vpack.c.b16 %v846, %v842
    %v1091 = vpack.c.b16 %v847, %v843
    %v1092 = vpack.c.b16 %v852, %v848
    %v1093 = vpack.c.b16 %v853, %v849
    %v1094 = vpack.c.b16 %v854, %v850
    %v1095 = vpack.c.b16 %v855, %v851
    %v1096 = vpack.c.b16 %v860, %v856
    %v1097 = vpack.c.b16 %v861, %v857
    %v1098 = vpack.c.b16 %v862, %v858
    %v1099 = vpack.c.b16 %v863, %v859
    %v1100 = vpack.c.b16 %v868, %v864
    %v1101 = vpack.c.b16 %v869, %v865
    %v1102 = vpack.c.b16 %v870, %v866
    %v1103 = vpack.c.b16 %v871, %v867
    %v1104 = vpack.c.b16 %v876, %v872
    %v1105 = vpack.c.b16 %v877, %v873
    %v1106 = vpack.c.b16 %v878, %v874
    %v1107 = vpack.c.b16 %v879, %v875
    %v1108 = vpack.c.b16 %v884, %v880
    %v1109 = vpack.c.b16 %v885, %v881
    %v1110 = vpack.c.b16 %v886, %v882
    %v1111 = vpack.c.b16 %v887, %v883
    %v1112 = vpack.c.b16 %v892, %v888
    %v1113 = vpack.c.b16 %v893, %v889
    %v1114 = vpack.c.b16 %v894, %v890
    %v1115 = vpack.c.b16 %v895, %v891
    %v1116 = vpack.c.b16 %v900, %v896
    %v1117 = vpack.c.b16 %v901, %v897
    %v1118 = vpack.c.b16 %v902, %v898
    %v1119 = vpack.c.b16 %v903, %v899
    %v1120 = vpack.c.b16 %v908, %v904
    %v1121 = vpack.c.b16 %v909, %v905
    %v1122 = vpack.c.b16 %v910, %v906
    %v1123 = vpack.c.b16 %v911, %v907
    %v1124 = vpack.c.b16 %v916, %v912
    %v1125 = vpack.c.b16 %v917, %v913
    %v1126 = vpack.c.b16 %v918, %v914
    %v1127 = vpack.c.b16 %v919, %v915
    %v1128 = vpack.c.b16 %v924, %v920
    %v1129 = vpack.c.b16 %v925, %v921
    %v1130 = vpack.c.b16 %v926, %v922
    %v1131 = vpack.c.b16 %v927, %v923
    %v1132 = vpack.c.b16 %v932, %v928
    %v1133 = vpack.c.b16 %v933, %v929
    %v1134 = vpack.c.b16 %v934, %v930
    %v1135 = vpack.c.b16 %v935, %v931
    %v1136 = vpack.c.b16 %v940, %v936
    %v1137 = vpack.c.b16 %v941, %v937
    %v1138 = vpack.c.b16 %v942, %v938
    %v1139 = vpack.c.b16 %v943, %v939
    %vm1336 = vcmask 130048
    %v1338 = vsel %vm1336, %v137, 0
    %1340 = vmatprep.subr.bf16.mxu0 %v945
    %1341 = vmatpush1.bf16.msra.mxu0 %v944
    %1342 = vmatprep.subr.bf16.mxu0 %v949
    %1343 = vmatpush1.bf16.msra.mxu0 %v948
    %1344 = vmatprep.subr.bf16.mxu0 %v953
    %1345 = vmatpush1.bf16.msra.mxu0 %v952
    %1346 = vmatprep.subr.bf16.mxu0 %v957
    %1347 = vmatpush1.bf16.msra.mxu0 %v956
    %1348 = vmatprep.subr.bf16.mxu0 %v961
    %1349 = vmatpush1.bf16.msra.mxu0 %v960
    %1350 = vmatprep.subr.bf16.mxu0 %v965
    %1351 = vmatpush1.bf16.msra.mxu0 %v964
    %1352 = vmatprep.subr.bf16.mxu0 %v969
    %1353 = vmatpush1.bf16.msra.mxu0 %v968
    %1354 = vmatprep.subr.bf16.mxu0 %v973
    %1355 = vmatpush1.bf16.msra.mxu0 %v972
    %1356 = vmatprep.subr.bf16.mxu0 %v977
    %1357 = vmatpush1.bf16.msra.mxu0 %v976
    %1358 = vmatprep.subr.bf16.mxu0 %v981
    %1359 = vmatpush1.bf16.msra.mxu0 %v980
    %1360 = vmatprep.subr.bf16.mxu0 %v985
    %1361 = vmatpush1.bf16.msra.mxu0 %v984
    %1362 = vmatprep.subr.bf16.mxu0 %v989
    %1363 = vmatpush1.bf16.msra.mxu0 %v988
    %1364 = vmatprep.subr.bf16.mxu0 %v993
    %1365 = vmatpush1.bf16.msra.mxu0 %v992
    %1366 = vmatprep.subr.bf16.mxu0 %v997
    %1367 = vmatpush1.bf16.msra.mxu0 %v996
    %1368 = vmatprep.subr.bf16.mxu0 %v1001
    %1369 = vmatpush1.bf16.msra.mxu0 %v1000
    %1370 = vmatprep.subr.bf16.mxu0 %v1005
    %1371 = vmatpush1.bf16.msra.mxu0 %v1004
    %1372 = vmatprep.mubr.bf16.mxu0 %v132
    %1373 = vmatmul.mubr.bf16.gmra.mrb[0].mxu0 %v131
    %v1374 = vpop.f32.mrb[0].mxu0
    %v1375 = vadd.f32 %v339, %v1374
    %v1376 = vpop.f32.mrb[0].mxu0
    %v1377 = vadd.f32 %v343, %v1376
    %v1378 = vpop.f32.mrb[0].mxu0
    %v1379 = vadd.f32 %v339, %v1378
    %v1380 = vpop.f32.mrb[0].mxu0
    %v1381 = vadd.f32 %v343, %v1380
    %1382 = vdwg.mxu0
    %1383 = vmatprep.subr.bf16.mxu0 %v1009
    %1384 = vmatpush1.bf16.msra.mxu0 %v1008
    %1385 = vmatprep.subr.bf16.mxu0 %v1013
    %1386 = vmatpush1.bf16.msra.mxu0 %v1012
    %1387 = vmatprep.subr.bf16.mxu0 %v1017
    %1388 = vmatpush1.bf16.msra.mxu0 %v1016
    %1389 = vmatprep.subr.bf16.mxu0 %v1021
    %1390 = vmatpush1.bf16.msra.mxu0 %v1020
    %1391 = vmatprep.subr.bf16.mxu0 %v1025
    %1392 = vmatpush1.bf16.msra.mxu0 %v1024
    %1393 = vmatprep.subr.bf16.mxu0 %v1029
    %1394 = vmatpush1.bf16.msra.mxu0 %v1028
    %1395 = vmatprep.subr.bf16.mxu0 %v1033
    %1396 = vmatpush1.bf16.msra.mxu0 %v1032
    %1397 = vmatprep.subr.bf16.mxu0 %v1037
    %1398 = vmatpush1.bf16.msra.mxu0 %v1036
    %1399 = vmatprep.subr.bf16.mxu0 %v1041
    %1400 = vmatpush1.bf16.msra.mxu0 %v1040
    %1401 = vmatprep.subr.bf16.mxu0 %v1045
    %1402 = vmatpush1.bf16.msra.mxu0 %v1044
    %1403 = vmatprep.subr.bf16.mxu0 %v1049
    %1404 = vmatpush1.bf16.msra.mxu0 %v1048
    %1405 = vmatprep.subr.bf16.mxu0 %v1053
    %1406 = vmatpush1.bf16.msra.mxu0 %v1052
    %1407 = vmatprep.subr.bf16.mxu0 %v1057
    %1408 = vmatpush1.bf16.msra.mxu0 %v1056
    %1409 = vmatprep.subr.bf16.mxu0 %v1061
    %1410 = vmatpush1.bf16.msra.mxu0 %v1060
    %1411 = vmatprep.subr.bf16.mxu0 %v1065
    %1412 = vmatpush1.bf16.msra.mxu0 %v1064
    %1413 = vmatprep.subr.bf16.mxu0 %v1069
    %1414 = vmatpush1.bf16.msra.mxu0 %v1068
    %1415 = vmatprep.mubr.bf16.mxu0 %v134
    %1416 = vmatmul.mubr.bf16.gmra.mrb[0].mxu0 %v133
    %v1417 = vpop.f32.mrb[0].mxu0
    %v1418 = vadd.f32 %v1375, %v1417
    %v1419 = vpop.f32.mrb[0].mxu0
    %v1420 = vadd.f32 %v1377, %v1419
    %v1421 = vpop.f32.mrb[0].mxu0
    %v1422 = vadd.f32 %v1379, %v1421
    %v1423 = vpop.f32.mrb[0].mxu0
    %v1424 = vadd.f32 %v1381, %v1423
    %1425 = vdwg.mxu0
    %1426 = vmatprep.subr.bf16.mxu0 %v1073
    %1427 = vmatpush1.bf16.msra.mxu0 %v1072
    %1428 = vmatprep.subr.bf16.mxu0 %v1077
    %1429 = vmatpush1.bf16.msra.mxu0 %v1076
    %1430 = vmatprep.subr.bf16.mxu0 %v1081
    %1431 = vmatpush1.bf16.msra.mxu0 %v1080
    %1432 = vmatprep.subr.bf16.mxu0 %v1085
    %1433 = vmatpush1.bf16.msra.mxu0 %v1084
    %1434 = vmatprep.subr.bf16.mxu0 %v1089
    %1435 = vmatpush1.bf16.msra.mxu0 %v1088
    %1436 = vmatprep.subr.bf16.mxu0 %v1093
    %1437 = vmatpush1.bf16.msra.mxu0 %v1092
    %1438 = vmatprep.subr.bf16.mxu0 %v1097
    %1439 = vmatpush1.bf16.msra.mxu0 %v1096
    %1440 = vmatprep.subr.bf16.mxu0 %v1101
    %1441 = vmatpush1.bf16.msra.mxu0 %v1100
    %1442 = vmatprep.subr.bf16.mxu0 %v1105
    %1443 = vmatpush1.bf16.msra.mxu0 %v1104
    %1444 = vmatprep.subr.bf16.mxu0 %v1109
    %1445 = vmatpush1.bf16.msra.mxu0 %v1108
    %1446 = vmatprep.subr.bf16.mxu0 %v1113
    %1447 = vmatpush1.bf16.msra.mxu0 %v1112
    %1448 = vmatprep.subr.bf16.mxu0 %v1117
    %1449 = vmatpush1.bf16.msra.mxu0 %v1116
    %1450 = vmatprep.subr.bf16.mxu0 %v1121
    %1451 = vmatpush1.bf16.msra.mxu0 %v1120
    %1452 = vmatprep.subr.bf16.mxu0 %v1125
    %1453 = vmatpush1.bf16.msra.mxu0 %v1124
    %1454 = vmatprep.subr.bf16.mxu0 %v1129
    %1455 = vmatpush1.bf16.msra.mxu0 %v1128
    %1456 = vmatprep.subr.bf16.mxu0 %v1133
    %1457 = vmatpush1.bf16.msra.mxu0 %v1132
    %1458 = vmatprep.mubr.bf16.mxu0 %v136
    %1459 = vmatmul.mubr.bf16.gmra.mrb[0].mxu0 %v135
    %v1460 = vpop.f32.mrb[0].mxu0
    %v1461 = vadd.f32 %v1418, %v1460
    %v1462 = vpop.f32.mrb[0].mxu0
    %v1463 = vadd.f32 %v1420, %v1462
    %v1464 = vpop.f32.mrb[0].mxu0
    %v1465 = vadd.f32 %v1422, %v1464
    %v1466 = vpop.f32.mrb[0].mxu0
    %v1467 = vadd.f32 %v1424, %v1466
    %1468 = vdwg.mxu0
    %1469 = vmatprep.subr.bf16.mxu0 %v1137
    %1470 = vmatpush1.bf16.msra.mxu0 %v1136
    %1471 = vmatprep.subr.bf16.mxu0 0
    %1472 = vmatpush1.bf16.msra.mxu0 0
    %1473 = vmatprep.subr.bf16.mxu0 0
    %1474 = vmatpush1.bf16.msra.mxu0 0
    %1475 = vmatprep.subr.bf16.mxu0 0
    %1476 = vmatpush1.bf16.msra.mxu0 0
    %1477 = vmatprep.subr.bf16.mxu0 0
    %1478 = vmatpush1.bf16.msra.mxu0 0
    %1479 = vmatprep.subr.bf16.mxu0 0
    %1480 = vmatpush1.bf16.msra.mxu0 0
    %1481 = vmatprep.subr.bf16.mxu0 0
    %1482 = vmatpush1.bf16.msra.mxu0 0
    %1483 = vmatprep.subr.bf16.mxu0 0
    %1484 = vmatpush1.bf16.msra.mxu0 0
    %1485 = vmatprep.subr.bf16.mxu0 0
    %1486 = vmatpush1.bf16.msra.mxu0 0
    %1487 = vmatprep.subr.bf16.mxu0 0
    %1488 = vmatpush1.bf16.msra.mxu0 0
    %1489 = vmatprep.subr.bf16.mxu0 0
    %1490 = vmatpush1.bf16.msra.mxu0 0
    %1491 = vmatprep.subr.bf16.mxu0 0
    %1492 = vmatpush1.bf16.msra.mxu0 0
    %1493 = vmatprep.subr.bf16.mxu0 0
    %1494 = vmatpush1.bf16.msra.mxu0 0
    %1495 = vmatprep.subr.bf16.mxu0 0
    %1496 = vmatpush1.bf16.msra.mxu0 0
    %1497 = vmatprep.subr.bf16.mxu0 0
    %1498 = vmatpush1.bf16.msra.mxu0 0
    %1499 = vmatprep.subr.bf16.mxu0 0
    %1500 = vmatpush1.bf16.msra.mxu0 0
    %1501 = vmatprep.mubr.bf16.mxu0 0
    %1502 = vmatmul.mubr.bf16.gmra.mrb[0].mxu0 %v1338
    %v1503 = vpop.f32.mrb[0].mxu0
    %v1504 = vadd.f32 %v1461, %v1503
    %v1505 = vpop.f32.mrb[0].mxu0
    %v1506 = vadd.f32 %v1463, %v1505
    %v1507 = vpop.f32.mrb[0].mxu0
    %v1508 = vadd.f32 %v1465, %v1507
    %v1509 = vpop.f32.mrb[0].mxu0
    %v1510 = vadd.f32 %v1467, %v1509
    %1511 = vdwg.mxu0
    %1512 = vmatprep.subr.bf16.mxu0 %v947
    %1513 = vmatpush1.bf16.msra.mxu0 %v946
    %1514 = vmatprep.subr.bf16.mxu0 %v951
    %1515 = vmatpush1.bf16.msra.mxu0 %v950
    %1516 = vmatprep.subr.bf16.mxu0 %v955
    %1517 = vmatpush1.bf16.msra.mxu0 %v954
    %1518 = vmatprep.subr.bf16.mxu0 %v959
    %1519 = vmatpush1.bf16.msra.mxu0 %v958
    %1520 = vmatprep.subr.bf16.mxu0 %v963
    %1521 = vmatpush1.bf16.msra.mxu0 %v962
    %1522 = vmatprep.subr.bf16.mxu0 %v967
    %1523 = vmatpush1.bf16.msra.mxu0 %v966
    %1524 = vmatprep.subr.bf16.mxu0 %v971
    %1525 = vmatpush1.bf16.msra.mxu0 %v970
    %1526 = vmatprep.subr.bf16.mxu0 %v975
    %1527 = vmatpush1.bf16.msra.mxu0 %v974
    %1528 = vmatprep.subr.bf16.mxu0 %v979
    %1529 = vmatpush1.bf16.msra.mxu0 %v978
    %1530 = vmatprep.subr.bf16.mxu0 %v983
    %1531 = vmatpush1.bf16.msra.mxu0 %v982
    %1532 = vmatprep.subr.bf16.mxu0 %v987
    %1533 = vmatpush1.bf16.msra.mxu0 %v986
    %1534 = vmatprep.subr.bf16.mxu0 %v991
    %1535 = vmatpush1.bf16.msra.mxu0 %v990
    %1536 = vmatprep.subr.bf16.mxu0 %v995
    %1537 = vmatpush1.bf16.msra.mxu0 %v994
    %1538 = vmatprep.subr.bf16.mxu0 %v999
    %1539 = vmatpush1.bf16.msra.mxu0 %v998
    %1540 = vmatprep.subr.bf16.mxu0 %v1003
    %1541 = vmatpush1.bf16.msra.mxu0 %v1002
    %1542 = vmatprep.subr.bf16.mxu0 %v1007
    %1543 = vmatpush1.bf16.msra.mxu0 %v1006
    %1544 = vmatprep.mubr.bf16.mxu0 %v132
    %1545 = vmatmul.mubr.bf16.gmra.mrb[0].mxu0 %v131
    %v1546 = vpop.f32.mrb[0].mxu0
    %v1547 = vadd.f32 %v347, %v1546
    %v1548 = vpop.f32.mrb[0].mxu0
    %v1549 = vadd.f32 %v351, %v1548
    %v1550 = vpop.f32.mrb[0].mxu0
    %v1551 = vadd.f32 %v347, %v1550
    %v1552 = vpop.f32.mrb[0].mxu0
    %v1553 = vadd.f32 %v351, %v1552
    %1554 = vdwg.mxu0
    %1555 = vmatprep.subr.bf16.mxu0 %v1011
    %1556 = vmatpush1.bf16.msra.mxu0 %v1010
    %1557 = vmatprep.subr.bf16.mxu0 %v1015
    %1558 = vmatpush1.bf16.msra.mxu0 %v1014
    %1559 = vmatprep.subr.bf16.mxu0 %v1019
    %1560 = vmatpush1.bf16.msra.mxu0 %v1018
    %1561 = vmatprep.subr.bf16.mxu0 %v1023
    %1562 = vmatpush1.bf16.msra.mxu0 %v1022
    %1563 = vmatprep.subr.bf16.mxu0 %v1027
    %1564 = vmatpush1.bf16.msra.mxu0 %v1026
    %1565 = vmatprep.subr.bf16.mxu0 %v1031
    %1566 = vmatpush1.bf16.msra.mxu0 %v1030
    %1567 = vmatprep.subr.bf16.mxu0 %v1035
    %1568 = vmatpush1.bf16.msra.mxu0 %v1034
    %1569 = vmatprep.subr.bf16.mxu0 %v1039
    %1570 = vmatpush1.bf16.msra.mxu0 %v1038
    %1571 = vmatprep.subr.bf16.mxu0 %v1043
    %1572 = vmatpush1.bf16.msra.mxu0 %v1042
    %1573 = vmatprep.subr.bf16.mxu0 %v1047
    %1574 = vmatpush1.bf16.msra.mxu0 %v1046
    %1575 = vmatprep.subr.bf16.mxu0 %v1051
    %1576 = vmatpush1.bf16.msra.mxu0 %v1050
    %1577 = vmatprep.subr.bf16.mxu0 %v1055
    %1578 = vmatpush1.bf16.msra.mxu0 %v1054
    %1579 = vmatprep.subr.bf16.mxu0 %v1059
    %1580 = vmatpush1.bf16.msra.mxu0 %v1058
    %1581 = vmatprep.subr.bf16.mxu0 %v1063
    %1582 = vmatpush1.bf16.msra.mxu0 %v1062
    %1583 = vmatprep.subr.bf16.mxu0 %v1067
    %1584 = vmatpush1.bf16.msra.mxu0 %v1066
    %1585 = vmatprep.subr.bf16.mxu0 %v1071
    %1586 = vmatpush1.bf16.msra.mxu0 %v1070
    %1587 = vmatprep.mubr.bf16.mxu0 %v134
    %1588 = vmatmul.mubr.bf16.gmra.mrb[0].mxu0 %v133
    %v1589 = vpop.f32.mrb[0].mxu0
    %v1590 = vadd.f32 %v1547, %v1589
    %v1591 = vpop.f32.mrb[0].mxu0
    %v1592 = vadd.f32 %v1549, %v1591
    %v1593 = vpop.f32.mrb[0].mxu0
    %v1594 = vadd.f32 %v1551, %v1593
    %v1595 = vpop.f32.mrb[0].mxu0
    %v1596 = vadd.f32 %v1553, %v1595
    %1597 = vdwg.mxu0
    %1598 = vmatprep.subr.bf16.mxu0 %v1075
    %1599 = vmatpush1.bf16.msra.mxu0 %v1074
    %1600 = vmatprep.subr.bf16.mxu0 %v1079
    %1601 = vmatpush1.bf16.msra.mxu0 %v1078
    %1602 = vmatprep.subr.bf16.mxu0 %v1083
    %1603 = vmatpush1.bf16.msra.mxu0 %v1082
    %1604 = vmatprep.subr.bf16.mxu0 %v1087
    %1605 = vmatpush1.bf16.msra.mxu0 %v1086
    %1606 = vmatprep.subr.bf16.mxu0 %v1091
    %1607 = vmatpush1.bf16.msra.mxu0 %v1090
    %1608 = vmatprep.subr.bf16.mxu0 %v1095
    %1609 = vmatpush1.bf16.msra.mxu0 %v1094
    %1610 = vmatprep.subr.bf16.mxu0 %v1099
    %1611 = vmatpush1.bf16.msra.mxu0 %v1098
    %1612 = vmatprep.subr.bf16.mxu0 %v1103
    %1613 = vmatpush1.bf16.msra.mxu0 %v1102
    %1614 = vmatprep.subr.bf16.mxu0 %v1107
    %1615 = vmatpush1.bf16.msra.mxu0 %v1106
    %1616 = vmatprep.subr.bf16.mxu0 %v1111
    %1617 = vmatpush1.bf16.msra.mxu0 %v1110
    %1618 = vmatprep.subr.bf16.mxu0 %v1115
    %1619 = vmatpush1.bf16.msra.mxu0 %v1114
    %1620 = vmatprep.subr.bf16.mxu0 %v1119
    %1621 = vmatpush1.bf16.msra.mxu0 %v1118
    %1622 = vmatprep.subr.bf16.mxu0 %v1123
    %1623 = vmatpush1.bf16.msra.mxu0 %v1122
    %1624 = vmatprep.subr.bf16.mxu0 %v1127
    %1625 = vmatpush1.bf16.msra.mxu0 %v1126
    %1626 = vmatprep.subr.bf16.mxu0 %v1131
    %1627 = vmatpush1.bf16.msra.mxu0 %v1130
    %1628 = vmatprep.subr.bf16.mxu0 %v1135
    %1629 = vmatpush1.bf16.msra.mxu0 %v1134
    %1630 = vmatprep.mubr.bf16.mxu0 %v136
    %1631 = vmatmul.mubr.bf16.gmra.mrb[0].mxu0 %v135
    %v1632 = vpop.f32.mrb[0].mxu0
    %v1633 = vadd.f32 %v1590, %v1632
    %v1634 = vpop.f32.mrb[0].mxu0
    %v1635 = vadd.f32 %v1592, %v1634
    %v1636 = vpop.f32.mrb[0].mxu0
    %v1637 = vadd.f32 %v1594, %v1636
    %v1638 = vpop.f32.mrb[0].mxu0
    %v1639 = vadd.f32 %v1596, %v1638
    %1640 = vdwg.mxu0
    %1641 = vmatprep.subr.bf16.mxu0 %v1139
    %1642 = vmatpush1.bf16.msra.mxu0 %v1138
    %1643 = vmatprep.subr.bf16.mxu0 0
    %1644 = vmatpush1.bf16.msra.mxu0 0
    %1645 = vmatprep.subr.bf16.mxu0 0
    %1646 = vmatpush1.bf16.msra.mxu0 0
    %1647 = vmatprep.subr.bf16.mxu0 0
    %1648 = vmatpush1.bf16.msra.mxu0 0
    %1649 = vmatprep.subr.bf16.mxu0 0
    %1650 = vmatpush1.bf16.msra.mxu0 0
    %1651 = vmatprep.subr.bf16.mxu0 0
    %1652 = vmatpush1.bf16.msra.mxu0 0
    %1653 = vmatprep.subr.bf16.mxu0 0
    %1654 = vmatpush1.bf16.msra.mxu0 0
    %1655 = vmatprep.subr.bf16.mxu0 0
    %1656 = vmatpush1.bf16.msra.mxu0 0
    %1657 = vmatprep.subr.bf16.mxu0 0
    %1658 = vmatpush1.bf16.msra.mxu0 0
    %1659 = vmatprep.subr.bf16.mxu0 0
    %1660 = vmatpush1.bf16.msra.mxu0 0
    %1661 = vmatprep.subr.bf16.mxu0 0
    %1662 = vmatpush1.bf16.msra.mxu0 0
    %1663 = vmatprep.subr.bf16.mxu0 0
    %1664 = vmatpush1.bf16.msra.mxu0 0
    %1665 = vmatprep.subr.bf16.mxu0 0
    %1666 = vmatpush1.bf16.msra.mxu0 0
    %1667 = vmatprep.subr.bf16.mxu0 0
    %1668 = vmatpush1.bf16.msra.mxu0 0
    %1669 = vmatprep.subr.bf16.mxu0 0
    %1670 = vmatpush1.bf16.msra.mxu0 0
    %1671 = vmatprep.subr.bf16.mxu0 0
    %1672 = vmatpush1.bf16.msra.mxu0 0
    %1673 = vmatprep.mubr.bf16.mxu0 0
    %1674 = vmatmul.mubr.bf16.gmra.mrb[0].mxu0 %v1338
    %v1675 = vpop.f32.mrb[0].mxu0
    %v1676 = vadd.f32 %v1633, %v1675
    %v1677 = vpop.f32.mrb[0].mxu0
    %v1678 = vadd.f32 %v1635, %v1677
    %v1679 = vpop.f32.mrb[0].mxu0
    %v1680 = vadd.f32 %v1637, %v1679
    %v1681 = vpop.f32.mrb[0].mxu0
    %v1682 = vadd.f32 %v1639, %v1681
    %1683 = vdwg.mxu0
    %v1684 = vmax.f32 %v1504, 0.0
    %v1685 = vmax.f32 %v1506, 0.0
    %v1686 = vmax.f32 %v1676, 0.0
    %v1687 = vmax.f32 %v1678, 0.0
    %v1688 = vmax.f32 %v1508, 0.0
    %v1689 = vmax.f32 %v1510, 0.0
    %v1690 = vmax.f32 %v1680, 0.0
    %v1691 = vmax.f32 %v1682, 0.0
    %v1692 = vpack.c.bf16 %v1688, %v1684
    %v1693 = vpack.c.bf16 %v1689, %v1685
    %v1694 = vpack.c.bf16 %v1690, %v1686
    %v1695 = vpack.c.bf16 %v1691, %v1687
    %v1696 = vld [vmem:[#allocation8] sm:$0xff]
    %v1697 = vld [vmem:[#allocation8 + $0x8] sm:$0xff]
    %v1698 = vld [vmem:[#allocation8 + $0x10] sm:$0xff]
    %v1699 = vld [vmem:[#allocation8 + $0x18] sm:$0xff]
    %v1700 = vld [vmem:[#allocation8 + $0x20] sm:$0xff]
    %v1701 = vld [vmem:[#allocation8 + $0x28] sm:$0xff]
    %v1702 = vld [vmem:[#allocation8 + $0x30] sm:$0xff]
    %v1703 = vld [vmem:[#allocation8 + $0x38] sm:$0xff]
    %v1704 = vld [vmem:[#allocation8 + $0x40] sm:$0xff]
    %v1705 = vld [vmem:[#allocation8 + $0x48] sm:$0xff]
    %v1706 = vld [vmem:[#allocation8 + $0x50] sm:$0xff]
    %v1707 = vld [vmem:[#allocation8 + $0x58] sm:$0xff]
    %v1708 = vld [vmem:[#allocation8 + $0x60] sm:$0xff]
    %v1709 = vld [vmem:[#allocation8 + $0x68] sm:$0xff]
    %v1710 = vld [vmem:[#allocation8 + $0x70] sm:$0xff]
    %v1711 = vld [vmem:[#allocation8 + $0x78] sm:$0xff]
    %v1712 = vld [vmem:[#allocation8 + $0x80] sm:$0xff]
    %v1713 = vld [vmem:[#allocation8 + $0x88] sm:$0xff]
    %v1714 = vld [vmem:[#allocation8 + $0x90] sm:$0xff]
    %v1715 = vld [vmem:[#allocation8 + $0x98] sm:$0xff]
    %v1716 = vld [vmem:[#allocation8 + $0xa0] sm:$0xff]
    %v1717 = vld [vmem:[#allocation8 + $0xa8] sm:$0xff]
    %v1718 = vld [vmem:[#allocation8 + $0xb0] sm:$0xff]
    %v1719 = vld [vmem:[#allocation8 + $0xb8] sm:$0xff]
    %v1720 = vld [vmem:[#allocation8 + $0xc0] sm:$0xff]
    %v1721 = vld [vmem:[#allocation8 + $0xc8] sm:$0xff]
    %v1722 = vld [vmem:[#allocation8 + $0xd0] sm:$0xff]
    %v1723 = vld [vmem:[#allocation8 + $0xd8] sm:$0xff]
    %v1724 = vld [vmem:[#allocation8 + $0xe0] sm:$0xff]
    %v1725 = vld [vmem:[#allocation8 + $0xe8] sm:$0xff]
    %v1726 = vld [vmem:[#allocation8 + $0xf0] sm:$0xff]
    %v1727 = vld [vmem:[#allocation8 + $0xf8] sm:$0xff]
    %v1728 = vld [vmem:[#allocation8 + $0x100] sm:$0xff]
    %v1729 = vld [vmem:[#allocation8 + $0x108] sm:$0xff]
    %v1730 = vld [vmem:[#allocation8 + $0x110] sm:$0xff]
    %v1731 = vld [vmem:[#allocation8 + $0x118] sm:$0xff]
    %v1732 = vld [vmem:[#allocation8 + $0x120] sm:$0xff]
    %v1733 = vld [vmem:[#allocation8 + $0x128] sm:$0xff]
    %v1734 = vld [vmem:[#allocation8 + $0x130] sm:$0xff]
    %v1735 = vld [vmem:[#allocation8 + $0x138] sm:$0xff]
    %v1736 = vld [vmem:[#allocation8 + $0x140] sm:$0xff]
    %v1737 = vld [vmem:[#allocation8 + $0x148] sm:$0xff]
    %v1738 = vld [vmem:[#allocation8 + $0x150] sm:$0xff]
    %v1739 = vld [vmem:[#allocation8 + $0x158] sm:$0xff]
    %v1740 = vld [vmem:[#allocation8 + $0x160] sm:$0xff]
    %v1741 = vld [vmem:[#allocation8 + $0x168] sm:$0xff]
    %v1742 = vld [vmem:[#allocation8 + $0x170] sm:$0xff]
    %v1743 = vld [vmem:[#allocation8 + $0x178] sm:$0xff]
    %v1744 = vld [vmem:[#allocation8 + $0x180] sm:$0xff]
    %v1745 = vld [vmem:[#allocation8 + $0x188] sm:$0xff]
    %v1746 = vld [vmem:[#allocation8 + $0x190] sm:$0xff]
    %v1747 = vld [vmem:[#allocation8 + $0x198] sm:$0xff]
    %v1748 = vld [vmem:[#allocation8 + $0x1a0] sm:$0xff]
    %v1749 = vld [vmem:[#allocation8 + $0x1a8] sm:$0xff]
    %v1750 = vld [vmem:[#allocation8 + $0x1b0] sm:$0xff]
    %v1751 = vld [vmem:[#allocation8 + $0x1b8] sm:$0xff]
    %v1752 = vld [vmem:[#allocation8 + $0x1c0] sm:$0xff]
    %v1753 = vld [vmem:[#allocation8 + $0x1c8] sm:$0xff]
    %v1754 = vld [vmem:[#allocation8 + $0x1d0] sm:$0xff]
    %v1755 = vld [vmem:[#allocation8 + $0x1d8] sm:$0xff]
    %v1756 = vld [vmem:[#allocation8 + $0x1e0] sm:$0xff]
    %v1757 = vld [vmem:[#allocation8 + $0x1e8] sm:$0xff]
    %v1758 = vld [vmem:[#allocation8 + $0x1f0] sm:$0xff]
    %v1759 = vld [vmem:[#allocation8 + $0x1f8] sm:$0xff]
    %v1760 = vld [vmem:[#allocation8 + $0x200] sm:$0xff]
    %v1761 = vld [vmem:[#allocation8 + $0x208] sm:$0xff]
    %v1762 = vld [vmem:[#allocation8 + $0x210] sm:$0xff]
    %v1763 = vld [vmem:[#allocation8 + $0x218] sm:$0xff]
    %v1764 = vld [vmem:[#allocation8 + $0x220] sm:$0xff]
    %v1765 = vld [vmem:[#allocation8 + $0x228] sm:$0xff]
    %v1766 = vld [vmem:[#allocation8 + $0x230] sm:$0xff]
    %v1767 = vld [vmem:[#allocation8 + $0x238] sm:$0xff]
    %v1768 = vld [vmem:[#allocation8 + $0x240] sm:$0xff]
    %v1769 = vld [vmem:[#allocation8 + $0x248] sm:$0xff]
    %v1770 = vld [vmem:[#allocation8 + $0x250] sm:$0xff]
    %v1771 = vld [vmem:[#allocation8 + $0x258] sm:$0xff]
    %v1772 = vld [vmem:[#allocation8 + $0x260] sm:$0xff]
    %v1773 = vld [vmem:[#allocation8 + $0x268] sm:$0xff]
    %v1774 = vld [vmem:[#allocation8 + $0x270] sm:$0xff]
    %v1775 = vld [vmem:[#allocation8 + $0x278] sm:$0xff]
    %v1776 = vld [vmem:[#allocation8 + $0x280] sm:$0xff]
    %v1777 = vld [vmem:[#allocation8 + $0x288] sm:$0xff]
    %v1778 = vld [vmem:[#allocation8 + $0x290] sm:$0xff]
    %v1779 = vld [vmem:[#allocation8 + $0x298] sm:$0xff]
    %v1780 = vld [vmem:[#allocation8 + $0x2a0] sm:$0xff]
    %v1781 = vld [vmem:[#allocation8 + $0x2a8] sm:$0xff]
    %v1782 = vld [vmem:[#allocation8 + $0x2b0] sm:$0xff]
    %v1783 = vld [vmem:[#allocation8 + $0x2b8] sm:$0xff]
    %v1784 = vld [vmem:[#allocation8 + $0x2c0] sm:$0xff]
    %v1785 = vld [vmem:[#allocation8 + $0x2c8] sm:$0xff]
    %v1786 = vld [vmem:[#allocation8 + $0x2d0] sm:$0xff]
    %v1787 = vld [vmem:[#allocation8 + $0x2d8] sm:$0xff]
    %v1788 = vld [vmem:[#allocation8 + $0x2e0] sm:$0xff]
    %v1789 = vld [vmem:[#allocation8 + $0x2e8] sm:$0xff]
    %v1790 = vld [vmem:[#allocation8 + $0x2f0] sm:$0xff]
    %v1791 = vld [vmem:[#allocation8 + $0x2f8] sm:$0xff]
    %v1792 = vld [vmem:[#allocation8 + $0x300] sm:$0xff]
    %v1793 = vld [vmem:[#allocation8 + $0x308] sm:$0xff]
    %v1794 = vld [vmem:[#allocation8 + $0x310] sm:$0xff]
    %v1795 = vld [vmem:[#allocation8 + $0x318] sm:$0xff]
    %v1796 = vld [vmem:[#allocation8 + $0x320] sm:$0xff]
    %v1797 = vld [vmem:[#allocation8 + $0x328] sm:$0xff]
    %v1798 = vld [vmem:[#allocation8 + $0x330] sm:$0xff]
    %v1799 = vld [vmem:[#allocation8 + $0x338] sm:$0xff]
    %v1800 = vld [vmem:[#allocation8 + $0x340] sm:$0xff]
    %v1801 = vld [vmem:[#allocation8 + $0x348] sm:$0xff]
    %v1802 = vld [vmem:[#allocation8 + $0x350] sm:$0xff]
    %v1803 = vld [vmem:[#allocation8 + $0x358] sm:$0xff]
    %v1804 = vld [vmem:[#allocation8 + $0x360] sm:$0xff]
    %v1805 = vld [vmem:[#allocation8 + $0x368] sm:$0xff]
    %v1806 = vld [vmem:[#allocation8 + $0x370] sm:$0xff]
    %v1807 = vld [vmem:[#allocation8 + $0x378] sm:$0xff]
    %v1808 = vld [vmem:[#allocation8 + $0x380] sm:$0xff]
    %v1809 = vld [vmem:[#allocation8 + $0x388] sm:$0xff]
    %v1810 = vld [vmem:[#allocation8 + $0x390] sm:$0xff]
    %v1811 = vld [vmem:[#allocation8 + $0x398] sm:$0xff]
    %v1812 = vld [vmem:[#allocation8 + $0x3a0] sm:$0xff]
    %v1813 = vld [vmem:[#allocation8 + $0x3a8] sm:$0xff]
    %v1814 = vld [vmem:[#allocation8 + $0x3b0] sm:$0xff]
    %v1815 = vld [vmem:[#allocation8 + $0x3b8] sm:$0xff]
    %v1816 = vld [vmem:[#allocation8 + $0x3c0] sm:$0xff]
    %v1817 = vld [vmem:[#allocation8 + $0x3c8] sm:$0xff]
    %v1818 = vld [vmem:[#allocation8 + $0x3d0] sm:$0xff]
    %v1819 = vld [vmem:[#allocation8 + $0x3d8] sm:$0xff]
    %v1820 = vld [vmem:[#allocation8 + $0x3e0] sm:$0xff]
    %v1821 = vld [vmem:[#allocation8 + $0x3e8] sm:$0xff]
    %v1822 = vld [vmem:[#allocation8 + $0x3f0] sm:$0xff]
    %v1823 = vld [vmem:[#allocation8 + $0x3f8] sm:$0xff]
    %v1824 = vld [vmem:[#allocation10] sm:$0xf]
    %v1826 = vlaneseq
    %v1827 = vshrl.u32 %v1826, 7
    %v1828 = vsub.s32 0, %v1827
    %v1829 = vrot.slane %v1824, %v1828
    %v1830 = vlaneseq
    %v1831 = vshrl.u32 %v1830, 7
    %v1832 = vsub.s32 1, %v1831
    %v1833 = vrot.slane %v1824, %v1832
    %v1834 = vlaneseq
    %v1835 = vshrl.u32 %v1834, 7
    %v1836 = vsub.s32 2, %v1835
    %v1837 = vrot.slane %v1824, %v1836
    %v1838 = vlaneseq
    %v1839 = vshrl.u32 %v1838, 7
    %v1840 = vsub.s32 3, %v1839
    %v1841 = vrot.slane %v1824, %v1840
    %v1974 = vunpack.c.l.b16 %v1696
    %v1975 = vunpack.c.h.b16 %v1696
    %v1976 = vunpack.c.l.b16 %v1697
    %v1977 = vunpack.c.h.b16 %v1697
    %v1978 = vunpack.c.l.b16 %v1698
    %v1979 = vunpack.c.h.b16 %v1698
    %v1980 = vunpack.c.l.b16 %v1699
    %v1981 = vunpack.c.h.b16 %v1699
    %v1982 = vunpack.c.l.b16 %v1700
    %v1983 = vunpack.c.h.b16 %v1700
    %v1984 = vunpack.c.l.b16 %v1701
    %v1985 = vunpack.c.h.b16 %v1701
    %v1986 = vunpack.c.l.b16 %v1702
    %v1987 = vunpack.c.h.b16 %v1702
    %v1988 = vunpack.c.l.b16 %v1703
    %v1989 = vunpack.c.h.b16 %v1703
    %v1990 = vunpack.c.l.b16 %v1704
    %v1991 = vunpack.c.h.b16 %v1704
    %v1992 = vunpack.c.l.b16 %v1705
    %v1993 = vunpack.c.h.b16 %v1705
    %v1994 = vunpack.c.l.b16 %v1706
    %v1995 = vunpack.c.h.b16 %v1706
    %v1996 = vunpack.c.l.b16 %v1707
    %v1997 = vunpack.c.h.b16 %v1707
    %v1998 = vunpack.c.l.b16 %v1708
    %v1999 = vunpack.c.h.b16 %v1708
    %v2000 = vunpack.c.l.b16 %v1709
    %v2001 = vunpack.c.h.b16 %v1709
    %v2002 = vunpack.c.l.b16 %v1710
    %v2003 = vunpack.c.h.b16 %v1710
    %v2004 = vunpack.c.l.b16 %v1711
    %v2005 = vunpack.c.h.b16 %v1711
    %v2006 = vunpack.c.l.b16 %v1712
    %v2007 = vunpack.c.h.b16 %v1712
    %v2008 = vunpack.c.l.b16 %v1713
    %v2009 = vunpack.c.h.b16 %v1713
    %v2010 = vunpack.c.l.b16 %v1714
    %v2011 = vunpack.c.h.b16 %v1714
    %v2012 = vunpack.c.l.b16 %v1715
    %v2013 = vunpack.c.h.b16 %v1715
    %v2014 = vunpack.c.l.b16 %v1716
    %v2015 = vunpack.c.h.b16 %v1716
    %v2016 = vunpack.c.l.b16 %v1717
    %v2017 = vunpack.c.h.b16 %v1717
    %v2018 = vunpack.c.l.b16 %v1718
    %v2019 = vunpack.c.h.b16 %v1718
    %v2020 = vunpack.c.l.b16 %v1719
    %v2021 = vunpack.c.h.b16 %v1719
    %v2022 = vunpack.c.l.b16 %v1720
    %v2023 = vunpack.c.h.b16 %v1720
    %v2024 = vunpack.c.l.b16 %v1721
    %v2025 = vunpack.c.h.b16 %v1721
    %v2026 = vunpack.c.l.b16 %v1722
    %v2027 = vunpack.c.h.b16 %v1722
    %v2028 = vunpack.c.l.b16 %v1723
    %v2029 = vunpack.c.h.b16 %v1723
    %v2030 = vunpack.c.l.b16 %v1724
    %v2031 = vunpack.c.h.b16 %v1724
    %v2032 = vunpack.c.l.b16 %v1725
    %v2033 = vunpack.c.h.b16 %v1725
    %v2034 = vunpack.c.l.b16 %v1726
    %v2035 = vunpack.c.h.b16 %v1726
    %v2036 = vunpack.c.l.b16 %v1727
    %v2037 = vunpack.c.h.b16 %v1727
    %v2038 = vunpack.c.l.b16 %v1728
    %v2039 = vunpack.c.h.b16 %v1728
    %v2040 = vunpack.c.l.b16 %v1729
    %v2041 = vunpack.c.h.b16 %v1729
    %v2042 = vunpack.c.l.b16 %v1730
    %v2043 = vunpack.c.h.b16 %v1730
    %v2044 = vunpack.c.l.b16 %v1731
    %v2045 = vunpack.c.h.b16 %v1731
    %v2046 = vunpack.c.l.b16 %v1732
    %v2047 = vunpack.c.h.b16 %v1732
    %v2048 = vunpack.c.l.b16 %v1733
    %v2049 = vunpack.c.h.b16 %v1733
    %v2050 = vunpack.c.l.b16 %v1734
    %v2051 = vunpack.c.h.b16 %v1734
    %v2052 = vunpack.c.l.b16 %v1735
    %v2053 = vunpack.c.h.b16 %v1735
    %v2054 = vunpack.c.l.b16 %v1736
    %v2055 = vunpack.c.h.b16 %v1736
    %v2056 = vunpack.c.l.b16 %v1737
    %v2057 = vunpack.c.h.b16 %v1737
    %v2058 = vunpack.c.l.b16 %v1738
    %v2059 = vunpack.c.h.b16 %v1738
    %v2060 = vunpack.c.l.b16 %v1739
    %v2061 = vunpack.c.h.b16 %v1739
    %v2062 = vunpack.c.l.b16 %v1740
    %v2063 = vunpack.c.h.b16 %v1740
    %v2064 = vunpack.c.l.b16 %v1741
    %v2065 = vunpack.c.h.b16 %v1741
    %v2066 = vunpack.c.l.b16 %v1742
    %v2067 = vunpack.c.h.b16 %v1742
    %v2068 = vunpack.c.l.b16 %v1743
    %v2069 = vunpack.c.h.b16 %v1743
    %v2070 = vunpack.c.l.b16 %v1744
    %v2071 = vunpack.c.h.b16 %v1744
    %v2072 = vunpack.c.l.b16 %v1745
    %v2073 = vunpack.c.h.b16 %v1745
    %v2074 = vunpack.c.l.b16 %v1746
    %v2075 = vunpack.c.h.b16 %v1746
    %v2076 = vunpack.c.l.b16 %v1747
    %v2077 = vunpack.c.h.b16 %v1747
    %v2078 = vunpack.c.l.b16 %v1748
    %v2079 = vunpack.c.h.b16 %v1748
    %v2080 = vunpack.c.l.b16 %v1749
    %v2081 = vunpack.c.h.b16 %v1749
    %v2082 = vunpack.c.l.b16 %v1750
    %v2083 = vunpack.c.h.b16 %v1750
    %v2084 = vunpack.c.l.b16 %v1751
    %v2085 = vunpack.c.h.b16 %v1751
    %v2086 = vunpack.c.l.b16 %v1752
    %v2087 = vunpack.c.h.b16 %v1752
    %v2088 = vunpack.c.l.b16 %v1753
    %v2089 = vunpack.c.h.b16 %v1753
    %v2090 = vunpack.c.l.b16 %v1754
    %v2091 = vunpack.c.h.b16 %v1754
    %v2092 = vunpack.c.l.b16 %v1755
    %v2093 = vunpack.c.h.b16 %v1755
    %v2094 = vunpack.c.l.b16 %v1756
    %v2095 = vunpack.c.h.b16 %v1756
    %v2096 = vunpack.c.l.b16 %v1757
    %v2097 = vunpack.c.h.b16 %v1757
    %v2098 = vunpack.c.l.b16 %v1758
    %v2099 = vunpack.c.h.b16 %v1758
    %v2100 = vunpack.c.l.b16 %v1759
    %v2101 = vunpack.c.h.b16 %v1759
    %v2102 = vunpack.c.l.b16 %v1760
    %v2103 = vunpack.c.h.b16 %v1760
    %v2104 = vunpack.c.l.b16 %v1761
    %v2105 = vunpack.c.h.b16 %v1761
    %v2106 = vunpack.c.l.b16 %v1762
    %v2107 = vunpack.c.h.b16 %v1762
    %v2108 = vunpack.c.l.b16 %v1763
    %v2109 = vunpack.c.h.b16 %v1763
    %v2110 = vunpack.c.l.b16 %v1764
    %v2111 = vunpack.c.h.b16 %v1764
    %v2112 = vunpack.c.l.b16 %v1765
    %v2113 = vunpack.c.h.b16 %v1765
    %v2114 = vunpack.c.l.b16 %v1766
    %v2115 = vunpack.c.h.b16 %v1766
    %v2116 = vunpack.c.l.b16 %v1767
    %v2117 = vunpack.c.h.b16 %v1767
    %v2118 = vunpack.c.l.b16 %v1768
    %v2119 = vunpack.c.h.b16 %v1768
    %v2120 = vunpack.c.l.b16 %v1769
    %v2121 = vunpack.c.h.b16 %v1769
    %v2122 = vunpack.c.l.b16 %v1770
    %v2123 = vunpack.c.h.b16 %v1770
    %v2124 = vunpack.c.l.b16 %v1771
    %v2125 = vunpack.c.h.b16 %v1771
    %v2126 = vunpack.c.l.b16 %v1772
    %v2127 = vunpack.c.h.b16 %v1772
    %v2128 = vunpack.c.l.b16 %v1773
    %v2129 = vunpack.c.h.b16 %v1773
    %v2130 = vunpack.c.l.b16 %v1774
    %v2131 = vunpack.c.h.b16 %v1774
    %v2132 = vunpack.c.l.b16 %v1775
    %v2133 = vunpack.c.h.b16 %v1775
    %v2134 = vunpack.c.l.b16 %v1776
    %v2135 = vunpack.c.h.b16 %v1776
    %v2136 = vunpack.c.l.b16 %v1777
    %v2137 = vunpack.c.h.b16 %v1777
    %v2138 = vunpack.c.l.b16 %v1778
    %v2139 = vunpack.c.h.b16 %v1778
    %v2140 = vunpack.c.l.b16 %v1779
    %v2141 = vunpack.c.h.b16 %v1779
    %v2142 = vunpack.c.l.b16 %v1780
    %v2143 = vunpack.c.h.b16 %v1780
    %v2144 = vunpack.c.l.b16 %v1781
    %v2145 = vunpack.c.h.b16 %v1781
    %v2146 = vunpack.c.l.b16 %v1782
    %v2147 = vunpack.c.h.b16 %v1782
    %v2148 = vunpack.c.l.b16 %v1783
    %v2149 = vunpack.c.h.b16 %v1783
    %v2150 = vunpack.c.l.b16 %v1784
    %v2151 = vunpack.c.h.b16 %v1784
    %v2152 = vunpack.c.l.b16 %v1785
    %v2153 = vunpack.c.h.b16 %v1785
    %v2154 = vunpack.c.l.b16 %v1786
    %v2155 = vunpack.c.h.b16 %v1786
    %v2156 = vunpack.c.l.b16 %v1787
    %v2157 = vunpack.c.h.b16 %v1787
    %v2158 = vunpack.c.l.b16 %v1788
    %v2159 = vunpack.c.h.b16 %v1788
    %v2160 = vunpack.c.l.b16 %v1789
    %v2161 = vunpack.c.h.b16 %v1789
    %v2162 = vunpack.c.l.b16 %v1790
    %v2163 = vunpack.c.h.b16 %v1790
    %v2164 = vunpack.c.l.b16 %v1791
    %v2165 = vunpack.c.h.b16 %v1791
    %v2166 = vunpack.c.l.b16 %v1792
    %v2167 = vunpack.c.h.b16 %v1792
    %v2168 = vunpack.c.l.b16 %v1793
    %v2169 = vunpack.c.h.b16 %v1793
    %v2170 = vunpack.c.l.b16 %v1794
    %v2171 = vunpack.c.h.b16 %v1794
    %v2172 = vunpack.c.l.b16 %v1795
    %v2173 = vunpack.c.h.b16 %v1795
    %v2174 = vunpack.c.l.b16 %v1796
    %v2175 = vunpack.c.h.b16 %v1796
    %v2176 = vunpack.c.l.b16 %v1797
    %v2177 = vunpack.c.h.b16 %v1797
    %v2178 = vunpack.c.l.b16 %v1798
    %v2179 = vunpack.c.h.b16 %v1798
    %v2180 = vunpack.c.l.b16 %v1799
    %v2181 = vunpack.c.h.b16 %v1799
    %v2182 = vunpack.c.l.b16 %v1800
    %v2183 = vunpack.c.h.b16 %v1800
    %v2184 = vunpack.c.l.b16 %v1801
    %v2185 = vunpack.c.h.b16 %v1801
    %v2186 = vunpack.c.l.b16 %v1802
    %v2187 = vunpack.c.h.b16 %v1802
    %v2188 = vunpack.c.l.b16 %v1803
    %v2189 = vunpack.c.h.b16 %v1803
    %v2190 = vunpack.c.l.b16 %v1804
    %v2191 = vunpack.c.h.b16 %v1804
    %v2192 = vunpack.c.l.b16 %v1805
    %v2193 = vunpack.c.h.b16 %v1805
    %v2194 = vunpack.c.l.b16 %v1806
    %v2195 = vunpack.c.h.b16 %v1806
    %v2196 = vunpack.c.l.b16 %v1807
    %v2197 = vunpack.c.h.b16 %v1807
    %v2198 = vunpack.c.l.b16 %v1808
    %v2199 = vunpack.c.h.b16 %v1808
    %v2200 = vunpack.c.l.b16 %v1809
    %v2201 = vunpack.c.h.b16 %v1809
    %v2202 = vunpack.c.l.b16 %v1810
    %v2203 = vunpack.c.h.b16 %v1810
    %v2204 = vunpack.c.l.b16 %v1811
    %v2205 = vunpack.c.h.b16 %v1811
    %v2206 = vunpack.c.l.b16 %v1812
    %v2207 = vunpack.c.h.b16 %v1812
    %v2208 = vunpack.c.l.b16 %v1813
    %v2209 = vunpack.c.h.b16 %v1813
    %v2210 = vunpack.c.l.b16 %v1814
    %v2211 = vunpack.c.h.b16 %v1814
    %v2212 = vunpack.c.l.b16 %v1815
    %v2213 = vunpack.c.h.b16 %v1815
    %v2214 = vunpack.c.l.b16 %v1816
    %v2215 = vunpack.c.h.b16 %v1816
    %v2216 = vunpack.c.l.b16 %v1817
    %v2217 = vunpack.c.h.b16 %v1817
    %v2218 = vunpack.c.l.b16 %v1818
    %v2219 = vunpack.c.h.b16 %v1818
    %v2220 = vunpack.c.l.b16 %v1819
    %v2221 = vunpack.c.h.b16 %v1819
    %v2222 = vunpack.c.l.b16 %v1820
    %v2223 = vunpack.c.h.b16 %v1820
    %v2224 = vunpack.c.l.b16 %v1821
    %v2225 = vunpack.c.h.b16 %v1821
    %v2226 = vunpack.c.l.b16 %v1822
    %v2227 = vunpack.c.h.b16 %v1822
    %v2228 = vunpack.c.l.b16 %v1823
    %v2229 = vunpack.c.h.b16 %v1823
    %v2230 = vpack.c.b16 %v1978, %v1974
    %v2231 = vpack.c.b16 %v1979, %v1975
    %v2232 = vpack.c.b16 %v1980, %v1976
    %v2233 = vpack.c.b16 %v1981, %v1977
    %v2234 = vpack.c.b16 %v1986, %v1982
    %v2235 = vpack.c.b16 %v1987, %v1983
    %v2236 = vpack.c.b16 %v1988, %v1984
    %v2237 = vpack.c.b16 %v1989, %v1985
    %v2238 = vpack.c.b16 %v1994, %v1990
    %v2239 = vpack.c.b16 %v1995, %v1991
    %v2240 = vpack.c.b16 %v1996, %v1992
    %v2241 = vpack.c.b16 %v1997, %v1993
    %v2242 = vpack.c.b16 %v2002, %v1998
    %v2243 = vpack.c.b16 %v2003, %v1999
    %v2244 = vpack.c.b16 %v2004, %v2000
    %v2245 = vpack.c.b16 %v2005, %v2001
    %v2246 = vpack.c.b16 %v2010, %v2006
    %v2247 = vpack.c.b16 %v2011, %v2007
    %v2248 = vpack.c.b16 %v2012, %v2008
    %v2249 = vpack.c.b16 %v2013, %v2009
    %v2250 = vpack.c.b16 %v2018, %v2014
    %v2251 = vpack.c.b16 %v2019, %v2015
    %v2252 = vpack.c.b16 %v2020, %v2016
    %v2253 = vpack.c.b16 %v2021, %v2017
    %v2254 = vpack.c.b16 %v2026, %v2022
    %v2255 = vpack.c.b16 %v2027, %v2023
    %v2256 = vpack.c.b16 %v2028, %v2024
    %v2257 = vpack.c.b16 %v2029, %v2025
    %v2258 = vpack.c.b16 %v2034, %v2030
    %v2259 = vpack.c.b16 %v2035, %v2031
    %v2260 = vpack.c.b16 %v2036, %v2032
    %v2261 = vpack.c.b16 %v2037, %v2033
    %v2262 = vpack.c.b16 %v2042, %v2038
    %v2263 = vpack.c.b16 %v2043, %v2039
    %v2264 = vpack.c.b16 %v2044, %v2040
    %v2265 = vpack.c.b16 %v2045, %v2041
    %v2266 = vpack.c.b16 %v2050, %v2046
    %v2267 = vpack.c.b16 %v2051, %v2047
    %v2268 = vpack.c.b16 %v2052, %v2048
    %v2269 = vpack.c.b16 %v2053, %v2049
    %v2270 = vpack.c.b16 %v2058, %v2054
    %v2271 = vpack.c.b16 %v2059, %v2055
    %v2272 = vpack.c.b16 %v2060, %v2056
    %v2273 = vpack.c.b16 %v2061, %v2057
    %v2274 = vpack.c.b16 %v2066, %v2062
    %v2275 = vpack.c.b16 %v2067, %v2063
    %v2276 = vpack.c.b16 %v2068, %v2064
    %v2277 = vpack.c.b16 %v2069, %v2065
    %v2278 = vpack.c.b16 %v2074, %v2070
    %v2279 = vpack.c.b16 %v2075, %v2071
    %v2280 = vpack.c.b16 %v2076, %v2072
    %v2281 = vpack.c.b16 %v2077, %v2073
    %v2282 = vpack.c.b16 %v2082, %v2078
    %v2283 = vpack.c.b16 %v2083, %v2079
    %v2284 = vpack.c.b16 %v2084, %v2080
    %v2285 = vpack.c.b16 %v2085, %v2081
    %v2286 = vpack.c.b16 %v2090, %v2086
    %v2287 = vpack.c.b16 %v2091, %v2087
    %v2288 = vpack.c.b16 %v2092, %v2088
    %v2289 = vpack.c.b16 %v2093, %v2089
    %v2290 = vpack.c.b16 %v2098, %v2094
    %v2291 = vpack.c.b16 %v2099, %v2095
    %v2292 = vpack.c.b16 %v2100, %v2096
    %v2293 = vpack.c.b16 %v2101, %v2097
    %v2294 = vpack.c.b16 %v2106, %v2102
    %v2295 = vpack.c.b16 %v2107, %v2103
    %v2296 = vpack.c.b16 %v2108, %v2104
    %v2297 = vpack.c.b16 %v2109, %v2105
    %v2298 = vpack.c.b16 %v2114, %v2110
    %v2299 = vpack.c.b16 %v2115, %v2111
    %v2300 = vpack.c.b16 %v2116, %v2112
    %v2301 = vpack.c.b16 %v2117, %v2113
    %v2302 = vpack.c.b16 %v2122, %v2118
    %v2303 = vpack.c.b16 %v2123, %v2119
    %v2304 = vpack.c.b16 %v2124, %v2120
    %v2305 = vpack.c.b16 %v2125, %v2121
    %v2306 = vpack.c.b16 %v2130, %v2126
    %v2307 = vpack.c.b16 %v2131, %v2127
    %v2308 = vpack.c.b16 %v2132, %v2128
    %v2309 = vpack.c.b16 %v2133, %v2129
    %v2310 = vpack.c.b16 %v2138, %v2134
    %v2311 = vpack.c.b16 %v2139, %v2135
    %v2312 = vpack.c.b16 %v2140, %v2136
    %v2313 = vpack.c.b16 %v2141, %v2137
    %v2314 = vpack.c.b16 %v2146, %v2142
    %v2315 = vpack.c.b16 %v2147, %v2143
    %v2316 = vpack.c.b16 %v2148, %v2144
    %v2317 = vpack.c.b16 %v2149, %v2145
    %v2318 = vpack.c.b16 %v2154, %v2150
    %v2319 = vpack.c.b16 %v2155, %v2151
    %v2320 = vpack.c.b16 %v2156, %v2152
    %v2321 = vpack.c.b16 %v2157, %v2153
    %v2322 = vpack.c.b16 %v2162, %v2158
    %v2323 = vpack.c.b16 %v2163, %v2159
    %v2324 = vpack.c.b16 %v2164, %v2160
    %v2325 = vpack.c.b16 %v2165, %v2161
    %v2326 = vpack.c.b16 %v2170, %v2166
    %v2327 = vpack.c.b16 %v2171, %v2167
    %v2328 = vpack.c.b16 %v2172, %v2168
    %v2329 = vpack.c.b16 %v2173, %v2169
    %v2330 = vpack.c.b16 %v2178, %v2174
    %v2331 = vpack.c.b16 %v2179, %v2175
    %v2332 = vpack.c.b16 %v2180, %v2176
    %v2333 = vpack.c.b16 %v2181, %v2177
    %v2334 = vpack.c.b16 %v2186, %v2182
    %v2335 = vpack.c.b16 %v2187, %v2183
    %v2336 = vpack.c.b16 %v2188, %v2184
    %v2337 = vpack.c.b16 %v2189, %v2185
    %v2338 = vpack.c.b16 %v2194, %v2190
    %v2339 = vpack.c.b16 %v2195, %v2191
    %v2340 = vpack.c.b16 %v2196, %v2192
    %v2341 = vpack.c.b16 %v2197, %v2193
    %v2342 = vpack.c.b16 %v2202, %v2198
    %v2343 = vpack.c.b16 %v2203, %v2199
    %v2344 = vpack.c.b16 %v2204, %v2200
    %v2345 = vpack.c.b16 %v2205, %v2201
    %v2346 = vpack.c.b16 %v2210, %v2206
    %v2347 = vpack.c.b16 %v2211, %v2207
    %v2348 = vpack.c.b16 %v2212, %v2208
    %v2349 = vpack.c.b16 %v2213, %v2209
    %v2350 = vpack.c.b16 %v2218, %v2214
    %v2351 = vpack.c.b16 %v2219, %v2215
    %v2352 = vpack.c.b16 %v2220, %v2216
    %v2353 = vpack.c.b16 %v2221, %v2217
    %v2354 = vpack.c.b16 %v2226, %v2222
    %v2355 = vpack.c.b16 %v2227, %v2223
    %v2356 = vpack.c.b16 %v2228, %v2224
    %v2357 = vpack.c.b16 %v2229, %v2225
    %2486 = vmatprep.subr.bf16.mxu0 %v2231
    %2487 = vmatpush1.bf16.msra.mxu0 %v2230
    %2488 = vmatprep.subr.bf16.mxu0 %v2235
    %2489 = vmatpush1.bf16.msra.mxu0 %v2234
    %2490 = vmatprep.subr.bf16.mxu0 %v2239
    %2491 = vmatpush1.bf16.msra.mxu0 %v2238
    %2492 = vmatprep.subr.bf16.mxu0 %v2243
    %2493 = vmatpush1.bf16.msra.mxu0 %v2242
    %2494 = vmatprep.subr.bf16.mxu0 %v2247
    %2495 = vmatpush1.bf16.msra.mxu0 %v2246
    %2496 = vmatprep.subr.bf16.mxu0 %v2251
    %2497 = vmatpush1.bf16.msra.mxu0 %v2250
    %2498 = vmatprep.subr.bf16.mxu0 %v2255
    %2499 = vmatpush1.bf16.msra.mxu0 %v2254
    %2500 = vmatprep.subr.bf16.mxu0 %v2259
    %2501 = vmatpush1.bf16.msra.mxu0 %v2258
    %2502 = vmatprep.subr.bf16.mxu0 %v2263
    %2503 = vmatpush1.bf16.msra.mxu0 %v2262
    %2504 = vmatprep.subr.bf16.mxu0 %v2267
    %2505 = vmatpush1.bf16.msra.mxu0 %v2266
    %2506 = vmatprep.subr.bf16.mxu0 %v2271
    %2507 = vmatpush1.bf16.msra.mxu0 %v2270
    %2508 = vmatprep.subr.bf16.mxu0 %v2275
    %2509 = vmatpush1.bf16.msra.mxu0 %v2274
    %2510 = vmatprep.subr.bf16.mxu0 %v2279
    %2511 = vmatpush1.bf16.msra.mxu0 %v2278
    %2512 = vmatprep.subr.bf16.mxu0 %v2283
    %2513 = vmatpush1.bf16.msra.mxu0 %v2282
    %2514 = vmatprep.subr.bf16.mxu0 %v2287
    %2515 = vmatpush1.bf16.msra.mxu0 %v2286
    %2516 = vmatprep.subr.bf16.mxu0 %v2291
    %2517 = vmatpush1.bf16.msra.mxu0 %v2290
    %2518 = vmatprep.mubr.bf16.mxu0 %v1693
    %2519 = vmatmul.mubr.bf16.gmra.mrb[0].mxu0 %v1692
    %v2520 = vpop.f32.mrb[0].mxu0
    %v2521 = vadd.f32 %v1829, %v2520
    %v2522 = vpop.f32.mrb[0].mxu0
    %v2523 = vadd.f32 %v1833, %v2522
    %v2524 = vpop.f32.mrb[0].mxu0
    %v2525 = vadd.f32 %v1829, %v2524
    %v2526 = vpop.f32.mrb[0].mxu0
    %v2527 = vadd.f32 %v1833, %v2526
    %2528 = vdwg.mxu0
    %2529 = vmatprep.subr.bf16.mxu0 %v2295
    %2530 = vmatpush1.bf16.msra.mxu0 %v2294
    %2531 = vmatprep.subr.bf16.mxu0 %v2299
    %2532 = vmatpush1.bf16.msra.mxu0 %v2298
    %2533 = vmatprep.subr.bf16.mxu0 %v2303
    %2534 = vmatpush1.bf16.msra.mxu0 %v2302
    %2535 = vmatprep.subr.bf16.mxu0 %v2307
    %2536 = vmatpush1.bf16.msra.mxu0 %v2306
    %2537 = vmatprep.subr.bf16.mxu0 %v2311
    %2538 = vmatpush1.bf16.msra.mxu0 %v2310
    %2539 = vmatprep.subr.bf16.mxu0 %v2315
    %2540 = vmatpush1.bf16.msra.mxu0 %v2314
    %2541 = vmatprep.subr.bf16.mxu0 %v2319
    %2542 = vmatpush1.bf16.msra.mxu0 %v2318
    %2543 = vmatprep.subr.bf16.mxu0 %v2323
    %2544 = vmatpush1.bf16.msra.mxu0 %v2322
    %2545 = vmatprep.subr.bf16.mxu0 %v2327
    %2546 = vmatpush1.bf16.msra.mxu0 %v2326
    %2547 = vmatprep.subr.bf16.mxu0 %v2331
    %2548 = vmatpush1.bf16.msra.mxu0 %v2330
    %2549 = vmatprep.subr.bf16.mxu0 %v2335
    %2550 = vmatpush1.bf16.msra.mxu0 %v2334
    %2551 = vmatprep.subr.bf16.mxu0 %v2339
    %2552 = vmatpush1.bf16.msra.mxu0 %v2338
    %2553 = vmatprep.subr.bf16.mxu0 %v2343
    %2554 = vmatpush1.bf16.msra.mxu0 %v2342
    %2555 = vmatprep.subr.bf16.mxu0 %v2347
    %2556 = vmatpush1.bf16.msra.mxu0 %v2346
    %2557 = vmatprep.subr.bf16.mxu0 %v2351
    %2558 = vmatpush1.bf16.msra.mxu0 %v2350
    %2559 = vmatprep.subr.bf16.mxu0 %v2355
    %2560 = vmatpush1.bf16.msra.mxu0 %v2354
    %2561 = vmatprep.mubr.bf16.mxu0 %v1695
    %2562 = vmatmul.mubr.bf16.gmra.mrb[0].mxu0 %v1694
    %v2563 = vpop.f32.mrb[0].mxu0
    %v2564 = vadd.f32 %v2521, %v2563
    %v2565 = vpop.f32.mrb[0].mxu0
    %v2566 = vadd.f32 %v2523, %v2565
    %v2567 = vpop.f32.mrb[0].mxu0
    %v2568 = vadd.f32 %v2525, %v2567
    %v2569 = vpop.f32.mrb[0].mxu0
    %v2570 = vadd.f32 %v2527, %v2569
    %2571 = vdwg.mxu0
    %2572 = vmatprep.subr.bf16.mxu0 %v2233
    %2573 = vmatpush1.bf16.msra.mxu0 %v2232
    %2574 = vmatprep.subr.bf16.mxu0 %v2237
    %2575 = vmatpush1.bf16.msra.mxu0 %v2236
    %2576 = vmatprep.subr.bf16.mxu0 %v2241
    %2577 = vmatpush1.bf16.msra.mxu0 %v2240
    %2578 = vmatprep.subr.bf16.mxu0 %v2245
    %2579 = vmatpush1.bf16.msra.mxu0 %v2244
    %2580 = vmatprep.subr.bf16.mxu0 %v2249
    %2581 = vmatpush1.bf16.msra.mxu0 %v2248
    %2582 = vmatprep.subr.bf16.mxu0 %v2253
    %2583 = vmatpush1.bf16.msra.mxu0 %v2252
    %2584 = vmatprep.subr.bf16.mxu0 %v2257
    %2585 = vmatpush1.bf16.msra.mxu0 %v2256
    %2586 = vmatprep.subr.bf16.mxu0 %v2261
    %2587 = vmatpush1.bf16.msra.mxu0 %v2260
    %2588 = vmatprep.subr.bf16.mxu0 %v2265
    %2589 = vmatpush1.bf16.msra.mxu0 %v2264
    %2590 = vmatprep.subr.bf16.mxu0 %v2269
    %2591 = vmatpush1.bf16.msra.mxu0 %v2268
    %2592 = vmatprep.subr.bf16.mxu0 %v2273
    %2593 = vmatpush1.bf16.msra.mxu0 %v2272
    %2594 = vmatprep.subr.bf16.mxu0 %v2277
    %2595 = vmatpush1.bf16.msra.mxu0 %v2276
    %2596 = vmatprep.subr.bf16.mxu0 %v2281
    %2597 = vmatpush1.bf16.msra.mxu0 %v2280
    %2598 = vmatprep.subr.bf16.mxu0 %v2285
    %2599 = vmatpush1.bf16.msra.mxu0 %v2284
    %2600 = vmatprep.subr.bf16.mxu0 %v2289
    %2601 = vmatpush1.bf16.msra.mxu0 %v2288
    %2602 = vmatprep.subr.bf16.mxu0 %v2293
    %2603 = vmatpush1.bf16.msra.mxu0 %v2292
    %2604 = vmatprep.mubr.bf16.mxu0 %v1693
    %2605 = vmatmul.mubr.bf16.gmra.mrb[0].mxu0 %v1692
    %v2606 = vpop.f32.mrb[0].mxu0
    %v2607 = vadd.f32 %v1837, %v2606
    %v2608 = vpop.f32.mrb[0].mxu0
    %v2609 = vadd.f32 %v1841, %v2608
    %v2610 = vpop.f32.mrb[0].mxu0
    %v2611 = vadd.f32 %v1837, %v2610
    %v2612 = vpop.f32.mrb[0].mxu0
    %v2613 = vadd.f32 %v1841, %v2612
    %2614 = vdwg.mxu0
    %2615 = vmatprep.subr.bf16.mxu0 %v2297
    %2616 = vmatpush1.bf16.msra.mxu0 %v2296
    %2617 = vmatprep.subr.bf16.mxu0 %v2301
    %2618 = vmatpush1.bf16.msra.mxu0 %v2300
    %2619 = vmatprep.subr.bf16.mxu0 %v2305
    %2620 = vmatpush1.bf16.msra.mxu0 %v2304
    %2621 = vmatprep.subr.bf16.mxu0 %v2309
    %2622 = vmatpush1.bf16.msra.mxu0 %v2308
    %2623 = vmatprep.subr.bf16.mxu0 %v2313
    %2624 = vmatpush1.bf16.msra.mxu0 %v2312
    %2625 = vmatprep.subr.bf16.mxu0 %v2317
    %2626 = vmatpush1.bf16.msra.mxu0 %v2316
    %2627 = vmatprep.subr.bf16.mxu0 %v2321
    %2628 = vmatpush1.bf16.msra.mxu0 %v2320
    %2629 = vmatprep.subr.bf16.mxu0 %v2325
    %2630 = vmatpush1.bf16.msra.mxu0 %v2324
    %2631 = vmatprep.subr.bf16.mxu0 %v2329
    %2632 = vmatpush1.bf16.msra.mxu0 %v2328
    %2633 = vmatprep.subr.bf16.mxu0 %v2333
    %2634 = vmatpush1.bf16.msra.mxu0 %v2332
    %2635 = vmatprep.subr.bf16.mxu0 %v2337
    %2636 = vmatpush1.bf16.msra.mxu0 %v2336
    %2637 = vmatprep.subr.bf16.mxu0 %v2341
    %2638 = vmatpush1.bf16.msra.mxu0 %v2340
    %2639 = vmatprep.subr.bf16.mxu0 %v2345
    %2640 = vmatpush1.bf16.msra.mxu0 %v2344
    %2641 = vmatprep.subr.bf16.mxu0 %v2349
    %2642 = vmatpush1.bf16.msra.mxu0 %v2348
    %2643 = vmatprep.subr.bf16.mxu0 %v2353
    %2644 = vmatpush1.bf16.msra.mxu0 %v2352
    %2645 = vmatprep.subr.bf16.mxu0 %v2357
    %2646 = vmatpush1.bf16.msra.mxu0 %v2356
    %2647 = vmatprep.mubr.bf16.mxu0 %v1695
    %2648 = vmatmul.mubr.bf16.gmra.mrb[0].mxu0 %v1694
    %v2649 = vpop.f32.mrb[0].mxu0
    %v2650 = vadd.f32 %v2607, %v2649
    %v2651 = vpop.f32.mrb[0].mxu0
    %v2652 = vadd.f32 %v2609, %v2651
    %v2653 = vpop.f32.mrb[0].mxu0
    %v2654 = vadd.f32 %v2611, %v2653
    %v2655 = vpop.f32.mrb[0].mxu0
    %v2656 = vadd.f32 %v2613, %v2655
    %2657 = vdwg.mxu0
    %v2658 = vmax.f32 %v2564, 0.0
    %v2659 = vmax.f32 %v2566, 0.0
    %v2660 = vmax.f32 %v2650, 0.0
    %v2661 = vmax.f32 %v2652, 0.0
    %v2662 = vmax.f32 %v2568, 0.0
    %v2663 = vmax.f32 %v2570, 0.0
    %v2664 = vmax.f32 %v2654, 0.0
    %v2665 = vmax.f32 %v2656, 0.0
    %v2666 = vpack.c.bf16 %v2662, %v2658
    %v2667 = vpack.c.bf16 %v2663, %v2659
    %v2668 = vpack.c.bf16 %v2664, %v2660
    %v2669 = vpack.c.bf16 %v2665, %v2661
    %v2670 = vld [vmem:[#allocation11] sm:$0xf]
    %v2671 = vld [vmem:[#allocation11 + $0x4] sm:$0xf]
    %v2672 = vld [vmem:[#allocation11 + $0x8] sm:$0xf]
    %v2673 = vld [vmem:[#allocation11 + $0xc] sm:$0xf]
    %v2674 = vld [vmem:[#allocation11 + $0x10] sm:$0xf]
    %v2675 = vld [vmem:[#allocation11 + $0x14] sm:$0xf]
    %v2676 = vld [vmem:[#allocation11 + $0x18] sm:$0xf]
    %v2677 = vld [vmem:[#allocation11 + $0x1c] sm:$0xf]
    %v2678 = vld [vmem:[#allocation11 + $0x20] sm:$0xf]
    %v2679 = vld [vmem:[#allocation11 + $0x24] sm:$0xf]
    %v2680 = vld [vmem:[#allocation11 + $0x28] sm:$0xf]
    %v2681 = vld [vmem:[#allocation11 + $0x2c] sm:$0xf]
    %v2682 = vld [vmem:[#allocation11 + $0x30] sm:$0xf]
    %v2683 = vld [vmem:[#allocation11 + $0x34] sm:$0xf]
    %v2684 = vld [vmem:[#allocation11 + $0x38] sm:$0xf]
    %v2685 = vld [vmem:[#allocation11 + $0x3c] sm:$0xf]
    %v2686 = vld [vmem:[#allocation11 + $0x40] sm:$0xf]
    %v2687 = vld [vmem:[#allocation11 + $0x44] sm:$0xf]
    %v2688 = vld [vmem:[#allocation11 + $0x48] sm:$0xf]
    %v2689 = vld [vmem:[#allocation11 + $0x4c] sm:$0xf]
    %v2690 = vld [vmem:[#allocation11 + $0x50] sm:$0xf]
    %v2691 = vld [vmem:[#allocation11 + $0x54] sm:$0xf]
    %v2692 = vld [vmem:[#allocation11 + $0x58] sm:$0xf]
    %v2693 = vld [vmem:[#allocation11 + $0x5c] sm:$0xf]
    %v2694 = vld [vmem:[#allocation11 + $0x60] sm:$0xf]
    %v2695 = vld [vmem:[#allocation11 + $0x64] sm:$0xf]
    %v2696 = vld [vmem:[#allocation11 + $0x68] sm:$0xf]
    %v2697 = vld [vmem:[#allocation11 + $0x6c] sm:$0xf]
    %v2698 = vld [vmem:[#allocation11 + $0x70] sm:$0xf]
    %v2699 = vld [vmem:[#allocation11 + $0x74] sm:$0xf]
    %v2700 = vld [vmem:[#allocation11 + $0x78] sm:$0xf]
    %v2701 = vld [vmem:[#allocation11 + $0x7c] sm:$0xf]
    %v2702 = vld [vmem:[#allocation11 + $0x80] sm:$0xf]
    %v2703 = vld [vmem:[#allocation11 + $0x84] sm:$0xf]
    %v2704 = vld [vmem:[#allocation11 + $0x88] sm:$0xf]
    %v2705 = vld [vmem:[#allocation11 + $0x8c] sm:$0xf]
    %v2706 = vld [vmem:[#allocation11 + $0x90] sm:$0xf]
    %v2707 = vld [vmem:[#allocation11 + $0x94] sm:$0xf]
    %v2708 = vld [vmem:[#allocation11 + $0x98] sm:$0xf]
    %v2709 = vld [vmem:[#allocation11 + $0x9c] sm:$0xf]
    %v2710 = vld [vmem:[#allocation11 + $0xa0] sm:$0xf]
    %v2711 = vld [vmem:[#allocation11 + $0xa4] sm:$0xf]
    %v2712 = vld [vmem:[#allocation11 + $0xa8] sm:$0xf]
    %v2713 = vld [vmem:[#allocation11 + $0xac] sm:$0xf]
    %v2714 = vld [vmem:[#allocation11 + $0xb0] sm:$0xf]
    %v2715 = vld [vmem:[#allocation11 + $0xb4] sm:$0xf]
    %v2716 = vld [vmem:[#allocation11 + $0xb8] sm:$0xf]
    %v2717 = vld [vmem:[#allocation11 + $0xbc] sm:$0xf]
    %v2718 = vld [vmem:[#allocation11 + $0xc0] sm:$0xf]
    %v2719 = vld [vmem:[#allocation11 + $0xc4] sm:$0xf]
    %v2720 = vld [vmem:[#allocation11 + $0xc8] sm:$0xf]
    %v2721 = vld [vmem:[#allocation11 + $0xcc] sm:$0xf]
    %v2722 = vld [vmem:[#allocation11 + $0xd0] sm:$0xf]
    %v2723 = vld [vmem:[#allocation11 + $0xd4] sm:$0xf]
    %v2724 = vld [vmem:[#allocation11 + $0xd8] sm:$0xf]
    %v2725 = vld [vmem:[#allocation11 + $0xdc] sm:$0xf]
    %v2726 = vld [vmem:[#allocation11 + $0xe0] sm:$0xf]
    %v2727 = vld [vmem:[#allocation11 + $0xe4] sm:$0xf]
    %v2728 = vld [vmem:[#allocation11 + $0xe8] sm:$0xf]
    %v2729 = vld [vmem:[#allocation11 + $0xec] sm:$0xf]
    %v2730 = vld [vmem:[#allocation11 + $0xf0] sm:$0xf]
    %v2731 = vld [vmem:[#allocation11 + $0xf4] sm:$0xf]
    %v2732 = vld [vmem:[#allocation11 + $0xf8] sm:$0xf]
    %v2733 = vld [vmem:[#allocation11 + $0xfc] sm:$0xf]
    %v2734 = vld [vmem:[#allocation13] sm:$0x1]
    %v2736 = vlaneseq
    %v2737 = vshrl.u32 %v2736, 7
    %v2738 = vsub.s32 0, %v2737
    %v2739 = vrot.slane %v2734, %v2738
    %v2805 = vunpack.c.l.b16 %v2670
    %v2806 = vunpack.c.l.b16 %v2671
    %v2807 = vunpack.c.l.b16 %v2672
    %v2808 = vunpack.c.l.b16 %v2673
    %v2809 = vunpack.c.l.b16 %v2674
    %v2810 = vunpack.c.l.b16 %v2675
    %v2811 = vunpack.c.l.b16 %v2676
    %v2812 = vunpack.c.l.b16 %v2677
    %v2813 = vunpack.c.l.b16 %v2678
    %v2814 = vunpack.c.l.b16 %v2679
    %v2815 = vunpack.c.l.b16 %v2680
    %v2816 = vunpack.c.l.b16 %v2681
    %v2817 = vunpack.c.l.b16 %v2682
    %v2818 = vunpack.c.l.b16 %v2683
    %v2819 = vunpack.c.l.b16 %v2684
    %v2820 = vunpack.c.l.b16 %v2685
    %v2821 = vunpack.c.l.b16 %v2686
    %v2822 = vunpack.c.l.b16 %v2687
    %v2823 = vunpack.c.l.b16 %v2688
    %v2824 = vunpack.c.l.b16 %v2689
    %v2825 = vunpack.c.l.b16 %v2690
    %v2826 = vunpack.c.l.b16 %v2691
    %v2827 = vunpack.c.l.b16 %v2692
    %v2828 = vunpack.c.l.b16 %v2693
    %v2829 = vunpack.c.l.b16 %v2694
    %v2830 = vunpack.c.l.b16 %v2695
    %v2831 = vunpack.c.l.b16 %v2696
    %v2832 = vunpack.c.l.b16 %v2697
    %v2833 = vunpack.c.l.b16 %v2698
    %v2834 = vunpack.c.l.b16 %v2699
    %v2835 = vunpack.c.l.b16 %v2700
    %v2836 = vunpack.c.l.b16 %v2701
    %v2837 = vunpack.c.l.b16 %v2702
    %v2838 = vunpack.c.l.b16 %v2703
    %v2839 = vunpack.c.l.b16 %v2704
    %v2840 = vunpack.c.l.b16 %v2705
    %v2841 = vunpack.c.l.b16 %v2706
    %v2842 = vunpack.c.l.b16 %v2707
    %v2843 = vunpack.c.l.b16 %v2708
    %v2844 = vunpack.c.l.b16 %v2709
    %v2845 = vunpack.c.l.b16 %v2710
    %v2846 = vunpack.c.l.b16 %v2711
    %v2847 = vunpack.c.l.b16 %v2712
    %v2848 = vunpack.c.l.b16 %v2713
    %v2849 = vunpack.c.l.b16 %v2714
    %v2850 = vunpack.c.l.b16 %v2715
    %v2851 = vunpack.c.l.b16 %v2716
    %v2852 = vunpack.c.l.b16 %v2717
    %v2853 = vunpack.c.l.b16 %v2718
    %v2854 = vunpack.c.l.b16 %v2719
    %v2855 = vunpack.c.l.b16 %v2720
    %v2856 = vunpack.c.l.b16 %v2721
    %v2857 = vunpack.c.l.b16 %v2722
    %v2858 = vunpack.c.l.b16 %v2723
    %v2859 = vunpack.c.l.b16 %v2724
    %v2860 = vunpack.c.l.b16 %v2725
    %v2861 = vunpack.c.l.b16 %v2726
    %v2862 = vunpack.c.l.b16 %v2727
    %v2863 = vunpack.c.l.b16 %v2728
    %v2864 = vunpack.c.l.b16 %v2729
    %v2865 = vunpack.c.l.b16 %v2730
    %v2866 = vunpack.c.l.b16 %v2731
    %v2867 = vunpack.c.l.b16 %v2732
    %v2868 = vunpack.c.l.b16 %v2733
    %v2869 = vpack.c.b16 %v2806, %v2805
    %v2870 = vpack.c.b16 %v2808, %v2807
    %v2871 = vpack.c.b16 %v2810, %v2809
    %v2872 = vpack.c.b16 %v2812, %v2811
    %v2873 = vpack.c.b16 %v2814, %v2813
    %v2874 = vpack.c.b16 %v2816, %v2815
    %v2875 = vpack.c.b16 %v2818, %v2817
    %v2876 = vpack.c.b16 %v2820, %v2819
    %v2877 = vpack.c.b16 %v2822, %v2821
    %v2878 = vpack.c.b16 %v2824, %v2823
    %v2879 = vpack.c.b16 %v2826, %v2825
    %v2880 = vpack.c.b16 %v2828, %v2827
    %v2881 = vpack.c.b16 %v2830, %v2829
    %v2882 = vpack.c.b16 %v2832, %v2831
    %v2883 = vpack.c.b16 %v2834, %v2833
    %v2884 = vpack.c.b16 %v2836, %v2835
    %v2885 = vpack.c.b16 %v2838, %v2837
    %v2886 = vpack.c.b16 %v2840, %v2839
    %v2887 = vpack.c.b16 %v2842, %v2841
    %v2888 = vpack.c.b16 %v2844, %v2843
    %v2889 = vpack.c.b16 %v2846, %v2845
    %v2890 = vpack.c.b16 %v2848, %v2847
    %v2891 = vpack.c.b16 %v2850, %v2849
    %v2892 = vpack.c.b16 %v2852, %v2851
    %v2893 = vpack.c.b16 %v2854, %v2853
    %v2894 = vpack.c.b16 %v2856, %v2855
    %v2895 = vpack.c.b16 %v2858, %v2857
    %v2896 = vpack.c.b16 %v2860, %v2859
    %v2897 = vpack.c.b16 %v2862, %v2861
    %v2898 = vpack.c.b16 %v2864, %v2863
    %v2899 = vpack.c.b16 %v2866, %v2865
    %v2900 = vpack.c.b16 %v2868, %v2867
    %2933 = vmatprep.subr.bf16.mxu0 0
    %2934 = vmatpush1.bf16.msra.mxu0 %v2869
    %2935 = vmatprep.subr.bf16.mxu0 0
    %2936 = vmatpush1.bf16.msra.mxu0 %v2870
    %2937 = vmatprep.subr.bf16.mxu0 0
    %2938 = vmatpush1.bf16.msra.mxu0 %v2871
    %2939 = vmatprep.subr.bf16.mxu0 0
    %2940 = vmatpush1.bf16.msra.mxu0 %v2872
    %2941 = vmatprep.subr.bf16.mxu0 0
    %2942 = vmatpush1.bf16.msra.mxu0 %v2873
    %2943 = vmatprep.subr.bf16.mxu0 0
    %2944 = vmatpush1.bf16.msra.mxu0 %v2874
    %2945 = vmatprep.subr.bf16.mxu0 0
    %2946 = vmatpush1.bf16.msra.mxu0 %v2875
    %2947 = vmatprep.subr.bf16.mxu0 0
    %2948 = vmatpush1.bf16.msra.mxu0 %v2876
    %2949 = vmatprep.subr.bf16.mxu0 0
    %2950 = vmatpush1.bf16.msra.mxu0 %v2877
    %2951 = vmatprep.subr.bf16.mxu0 0
    %2952 = vmatpush1.bf16.msra.mxu0 %v2878
    %2953 = vmatprep.subr.bf16.mxu0 0
    %2954 = vmatpush1.bf16.msra.mxu0 %v2879
    %2955 = vmatprep.subr.bf16.mxu0 0
    %2956 = vmatpush1.bf16.msra.mxu0 %v2880
    %2957 = vmatprep.subr.bf16.mxu0 0
    %2958 = vmatpush1.bf16.msra.mxu0 %v2881
    %2959 = vmatprep.subr.bf16.mxu0 0
    %2960 = vmatpush1.bf16.msra.mxu0 %v2882
    %2961 = vmatprep.subr.bf16.mxu0 0
    %2962 = vmatpush1.bf16.msra.mxu0 %v2883
    %2963 = vmatprep.subr.bf16.mxu0 0
    %2964 = vmatpush1.bf16.msra.mxu0 %v2884
    %2965 = vmatprep.mubr.bf16.mxu0 %v2667
    %2966 = vmatmul.mubr.bf16.gmra.mrb[0].mxu0 %v2666
    %v2967 = vpop.f32.mrb[0].mxu0
    %v2968 = vadd.f32 %v2739, %v2967
    %v2969 = vpop.f32.mrb[0].mxu0
    %v2970 = vpop.f32.mrb[0].mxu0
    %v2971 = vadd.f32 %v2739, %v2970
    %v2972 = vpop.f32.mrb[0].mxu0
    %2973 = vdwg.mxu0
    %2974 = vmatprep.subr.bf16.mxu0 0
    %2975 = vmatpush1.bf16.msra.mxu0 %v2885
    %2976 = vmatprep.subr.bf16.mxu0 0
    %2977 = vmatpush1.bf16.msra.mxu0 %v2886
    %2978 = vmatprep.subr.bf16.mxu0 0
    %2979 = vmatpush1.bf16.msra.mxu0 %v2887
    %2980 = vmatprep.subr.bf16.mxu0 0
    %2981 = vmatpush1.bf16.msra.mxu0 %v2888
    %2982 = vmatprep.subr.bf16.mxu0 0
    %2983 = vmatpush1.bf16.msra.mxu0 %v2889
    %2984 = vmatprep.subr.bf16.mxu0 0
    %2985 = vmatpush1.bf16.msra.mxu0 %v2890
    %2986 = vmatprep.subr.bf16.mxu0 0
    %2987 = vmatpush1.bf16.msra.mxu0 %v2891
    %2988 = vmatprep.subr.bf16.mxu0 0
    %2989 = vmatpush1.bf16.msra.mxu0 %v2892
    %2990 = vmatprep.subr.bf16.mxu0 0
    %2991 = vmatpush1.bf16.msra.mxu0 %v2893
    %2992 = vmatprep.subr.bf16.mxu0 0
    %2993 = vmatpush1.bf16.msra.mxu0 %v2894
    %2994 = vmatprep.subr.bf16.mxu0 0
    %2995 = vmatpush1.bf16.msra.mxu0 %v2895
    %2996 = vmatprep.subr.bf16.mxu0 0
    %2997 = vmatpush1.bf16.msra.mxu0 %v2896
    %2998 = vmatprep.subr.bf16.mxu0 0
    %2999 = vmatpush1.bf16.msra.mxu0 %v2897
    %3000 = vmatprep.subr.bf16.mxu0 0
    %3001 = vmatpush1.bf16.msra.mxu0 %v2898
    %3002 = vmatprep.subr.bf16.mxu0 0
    %3003 = vmatpush1.bf16.msra.mxu0 %v2899
    %3004 = vmatprep.subr.bf16.mxu0 0
    %3005 = vmatpush1.bf16.msra.mxu0 %v2900
    %3006 = vmatprep.mubr.bf16.mxu0 %v2669
    %3007 = vmatmul.mubr.bf16.gmra.mrb[0].mxu0 %v2668
    %v3008 = vpop.f32.mrb[0].mxu0
    %v3009 = vadd.f32 %v2968, %v3008
    %v3010 = vpop.f32.mrb[0].mxu0
    %v3011 = vpop.f32.mrb[0].mxu0
    %v3012 = vadd.f32 %v2971, %v3011
    %v3013 = vpop.f32.mrb[0].mxu0
    %3014 = vdwg.mxu0
    %3015 = vst [vmem:[#allocation14] sm:$0xff] %v3009
    %3016 = vst [vmem:[#allocation14 + $0x8] sm:$0xff] %v3012
    // Predicated region
    $region58: #{mlp_forward.1} parent=1 // pred_check
      _
    $region59: #{mlp_forward.1} parent=1 // pred_check_branch
      %3018 = sbr.rel (0) target = $region61
    $region60: #{mlp_forward.1} parent=1 // pred_region
      %s3020 = ssub.s32 256, 256
      %3021 = vsyncadd [#allocation4], %s3020
      %s3022 = sshll.u32 [#allocation14], 4
      %s3023 = int_to_ptr.vmem [resolvable:$true] %s3022
      %3028 = dma.vmem_to_hbm [thread:$0]  %s3023, 256, %s7, [#allocation4], 128, 128, 8
    $region61: #{mlp_forward.1} parent=1 // pred_fallthru
      _
    // Predicated region
    $region62: #{mlp_forward.1} parent=1 // pred_check
      _
    $region63: #{mlp_forward.1} parent=1 // pred_check_branch
      %3030 = sbr.rel (0) target = $region65
    $region64: #{mlp_forward.1} parent=1 // pred_region
      %3031 = dma.done [#allocation4], 256
    $region65: #{mlp_forward.1} parent=1 // pred_fallthru
      _
    %3032 = vsyncpa [#allocation3], 1
    %3033 = vsyncpa [#allocation6], 1
    %3034 = vsyncpa [#allocation9], 1
    %3035 = vsyncpa [#allocation12], 1
    %3036 = vsyncpa [#allocation4], 1

</llo_original>
